<compile_context>
chip_gen: v5e
topology: v5e:2x2
jax: 0.10.0
libtpu: 0.0.40
codegen_flags: <defaults>
</compile_context>

<pallas_src>
import functools
import math

import jax
import jax.numpy as jnp
from jax.experimental import pallas as pl
from jax.experimental.pallas import tpu as pltpu

LRELU_SLOPE = 0.01   # F.leaky_relu default
GAT_SLOPE = 0.2      # GATConv internal leaky relu


# --------------------------------------------------------------------------
# Fused kernel: Bt batch samples per grid step, everything stays in VMEM/vregs.
# --------------------------------------------------------------------------
def gcn_emb_disc_kernel(
    x_ref, emb_ref, pavg_ref,
    w1_ref, b1_ref, w2_ref, b2_ref, w3_ref, b3_ref,
    g1w_ref, g1b_ref, g2w_ref, g2b_ref,
    l2w_ref, l2b_ref, ew_ref, eb_ref, l3wa_ref, l3wb_ref, l3b_ref,
    o_ref, *, bt, nc, np_):

    def leaky(v, slope):
        return jnp.where(v > 0, v, slope * v)

    def bf16(v):
        return v.astype(jnp.bfloat16)

    def gcn_conv(h2d, w_ref, b_ref):
        # Fully-connected piece group with self loops: D^-1/2 (A+I) D^-1/2 has
        # every in-group entry == 1/NP -> exact group mean, done as a single
        # block-diagonal MXU matmul (no small-group reshape/relayout).
        agg = jnp.dot(pavg_ref[...], bf16(h2d), preferred_element_type=jnp.float32)
        return (jnp.dot(bf16(agg), w_ref[...], preferred_element_type=jnp.float32)
                + b_ref[...])

    def gat_pool(h2d, groups, per, wext_ref, b_ref):
        # Single-head GATConv on fully-connected groups (self loops included),
        # fused with the mean-over-group pooling that follows it in the model.
        f = wext_ref.shape[1] - 2
        xe = jnp.dot(bf16(h2d), wext_ref[...],
                     preferred_element_type=jnp.float32)      # [G*P, F+2]
        xe3 = xe.reshape(groups, per, f + 2)
        xp3 = xe3[:, :, :f]                                   # [G,P,F]  W x
        s_src = xe3[:, :, f]                                  # [G,P]  a_src.(Wx)
        s_dst = xe3[:, :, f + 1]                              # [G,P]  a_dst.(Wx)
        e = leaky(s_dst[:, :, None] + s_src[:, None, :], GAT_SLOPE)   # [G,P,P]
        e = e - jnp.max(e, axis=-1, keepdims=True)
        p = jnp.exp(e)
        alpha = p * pl.reciprocal(jnp.sum(p, axis=-1, keepdims=True), approx=True)
        # mean_i ( sum_j alpha_ij (W x_j) ) == sum_j (mean_i alpha_ij) (W x_j)
        abar = jnp.mean(alpha, axis=1)                        # [G,P]
        out = abar[:, 0:1] * xp3[:, 0, :]
        for j in range(1, per):                               # tiny static unroll
            out = out + abar[:, j:j + 1] * xp3[:, j, :]       # VPU MACs
        return out + b_ref[...]                               # [G,F]

    x = x_ref[0]                                              # [Bt*NC*NP, 19]
    emb = emb_ref[0]                                          # [Bt, 512]

    # conv1 -> relu -> dropout(identity) ; conv2 / conv3 -> leaky_relu
    h = jnp.maximum(gcn_conv(x, w1_ref, b1_ref), 0.0)
    h = leaky(gcn_conv(h, w2_ref, b2_ref), LRELU_SLOPE)
    h = leaky(gcn_conv(h, w3_ref, b3_ref), LRELU_SLOPE)

    # GAT over pieces + mean over pieces, then GAT over crosses + mean over crosses
    hp = gat_pool(h, bt * nc, np_, g1w_ref, g1b_ref)          # [Bt*NC, 64]
    hc = gat_pool(hp, bt, nc, g2w_ref, g2b_ref)               # [Bt, 64]

    # linear2 / emb_linear, both followed by leaky_relu
    z = leaky(jnp.dot(bf16(hc), l2w_ref[...], preferred_element_type=jnp.float32)
              + l2b_ref[...], LRELU_SLOPE)                    # [Bt,128]
    ze = leaky(jnp.dot(bf16(emb), ew_ref[...], preferred_element_type=jnp.float32)
               + eb_ref[...], LRELU_SLOPE)                    # [Bt,128]

    # cat([z, ze], -1) @ W3  ==  z @ W3[:128] + ze @ W3[128:]   (no lane concat)
    logit = (jnp.dot(bf16(z), l3wa_ref[...], preferred_element_type=jnp.float32)
             + jnp.dot(bf16(ze), l3wb_ref[...], preferred_element_type=jnp.float32)
             + l3b_ref[...])                                  # [Bt,1]
    o_ref[...] = (1.0 / (1.0 + jnp.exp(-logit))).reshape(1, bt, 1)


# --------------------------------------------------------------------------
# Wrapper
# --------------------------------------------------------------------------
def _pick_bt(batch, nodes, target_rows):
    """Largest Bt dividing `batch` with Bt * nodes <= target_rows (cap at batch)."""
    cap = max(1, min(batch, max(1, target_rows // max(1, nodes))))
    best = 1
    for bt in range(1, cap + 1):
        if batch % bt == 0:
            best = bt
    return best


def gcn_emb_disc_forward(x, emb, params, B, NC, NP, target_rows=256):
    nodes = NC * NP
    Bt = _pick_bt(B, nodes, target_rows)   # ~256 rows/step (v6e/v7x); 128 on v5e
    steps = B // Bt
    rows = Bt * nodes
    fin = x.shape[-1]

    x3 = x.reshape(steps, rows, fin).astype(jnp.float32)
    emb3 = emb.reshape(steps, Bt, emb.shape[-1]).astype(jnp.float32)

    # ---- host-side weight packing (bf16 matmul operands, f32 biases) ----
    def bf(a):
        return a.astype(jnp.bfloat16)

    def gat_ext(p):   # [64, 66] = [W | W a_src^T | W a_dst^T]
        w = p["w"]
        return jnp.concatenate(
            [w, w @ p["att_src"].reshape(-1, 1), w @ p["att_dst"].reshape(-1, 1)],
            axis=1)

    d2 = params["linear2"]["w"].shape[1]                 # 128
    w3 = params["linear3"]["w"]                          # [256, 1]
    weights = [
        bf(params["conv1"]["w"]), params["conv1"]["b"],
        bf(params["conv2"]["w"]), params["conv2"]["b"],
        bf(params["conv3"]["w"]), params["conv3"]["b"],
        bf(gat_ext(params["gat1"])), params["gat1"]["b"],
        bf(gat_ext(params["gat2"])), params["gat2"]["b"],
        bf(params["linear2"]["w"]), params["linear2"]["b"],
        bf(params["emb_linear"]["w"]), params["emb_linear"]["b"],
        bf(w3[:d2]), bf(w3[d2:]), params["linear3"]["b"],
    ]

    # Block-diagonal piece-group averaging matrix (exact GCN aggregation for a
    # fully-connected group with self loops); 1/NP == 0.25 is exact in bf16.
    gid = jnp.arange(rows) // NP
    pavg = ((gid[:, None] == gid[None, :]).astype(jnp.float32) / NP).astype(jnp.bfloat16)

    def whole_spec(shape):
        nd = len(shape)
        return pl.BlockSpec(tuple(shape), lambda g, _nd=nd: (0,) * _nd)

    in_specs = ([pl.BlockSpec((1, rows, fin), lambda g: (g, 0, 0)),
                 pl.BlockSpec((1, Bt, emb3.shape[-1]), lambda g: (g, 0, 0)),
                 whole_spec(pavg.shape)]
                + [whole_spec(w.shape) for w in weights])

    # Advisory cost estimate so XLA can schedule around this small custom call.
    flops_step = 2 * (
        rows * rows * (fin + 32 + 64)                       # P_avg aggregations
        + rows * (fin * 32 + 32 * 64 + 64 * 64 + 64 * 66)   # GCN + gat1 projections
        + (Bt * NC) * 64 * 66                               # gat2 projection
        + Bt * (64 * d2 + 512 * d2 + 2 * d2))               # linear2/emb_linear/linear3
    weight_bytes = sum(math.prod(w.shape) * w.dtype.itemsize for w in weights)
    io_bytes = (math.prod(x3.shape) * 4 + math.prod(emb3.shape) * 4
                + math.prod(pavg.shape) * 2 + B * 4)
    cost = pl.CostEstimate(
        flops=int(steps * flops_step),
        transcendentals=int(B * (NC * NP * NP + NC * NC + 2)),
        bytes_accessed=int(io_bytes + steps * weight_bytes))

    kernel = functools.partial(gcn_emb_disc_kernel, bt=Bt, nc=NC, np_=NP)

    out = pl.pallas_call(
        kernel,
        grid=(steps,),
        in_specs=in_specs,
        out_specs=pl.BlockSpec((1, Bt, 1), lambda g: (g, 0, 0)),
        out_shape=jax.ShapeDtypeStruct((steps, Bt, 1), jnp.float32),
        compiler_params=pltpu.CompilerParams(
            dimension_semantics=("parallel",)),     # v7x: split steps across TCs
        cost_estimate=cost,
    )(x3, emb3, pavg, *weights)
    return out.reshape(B, 1)


# --------------------------------------------------------------------------
# Pure-JAX f32 reference (same graph assumptions) for a correctness check
# --------------------------------------------------------------------------
def ref_forward(x, emb, params, B, NC, NP):
    def lrelu(v, s=LRELU_SLOPE):
        return jnp.where(v > 0, v, s * v)

    def gcn(h, p, per):
        f = h.shape[-1]
        h3 = h.reshape(-1, per, f)
        agg = jnp.broadcast_to(h3.mean(axis=1, keepdims=True), h3.shape).reshape(-1, f)
        return agg @ p["w"] + p["b"]

    def gat(h, per, p):
        xp = h @ p["w"]
        f = xp.shape[-1]
        xp3 = xp.reshape(-1, per, f)
        s_src = (xp3 * p["att_src"].reshape(1, 1, f)).sum(-1)
        s_dst = (xp3 * p["att_dst"].reshape(1, 1, f)).sum(-1)
        e = lrelu(s_dst[:, :, None] + s_src[:, None, :], GAT_SLOPE)
        a = jax.nn.softmax(e, axis=-1)
        return jnp.einsum("gij,gjf->gif", a, xp3) + p["b"].reshape(1, 1, f)

    h = jnp.maximum(gcn(x, params["conv1"], NP), 0.0)
    h = lrelu(gcn(h, params["conv2"], NP))
    h = lrelu(gcn(h, params["conv3"], NP))
    hp = gat(h, NP, params["gat1"]).mean(axis=1)             # [B*NC, 64]
    hc = gat(hp, NC, params["gat2"]).mean(axis=1)            # [B, 64]
    z = lrelu(hc @ params["linear2"]["w"] + params["linear2"]["b"])
    ze = lrelu(emb @ params["emb_linear"]["w"] + params["emb_linear"]["b"])
    zc = jnp.concatenate([z, ze], axis=-1)
    return jax.nn.sigmoid(zc @ params["linear3"]["w"] + params["linear3"]["b"])


# --------------------------------------------------------------------------
# Deterministic parameters
# --------------------------------------------------------------------------
def init_params(key):
    keys = iter(jax.random.split(key, 24))

    def lin(i, o):
        s = 1.0 / jnp.sqrt(jnp.float32(i))
        w = jax.random.normal(next(keys), (i, o), jnp.float32) * s
        b = jax.random.normal(next(keys), (1, o), jnp.float32) * s
        return {"w": w, "b": b}

    def gatp(i, o):
        l = lin(i, o)
        return {"w": l["w"], "b": l["b"],
                "att_src": 0.1 * jax.random.normal(next(keys), (1, o), jnp.float32),
                "att_dst": 0.1 * jax.random.normal(next(keys), (1, o), jnp.float32)}

    return {
        "conv1": lin(19, 32),
        "conv2": lin(32, 64),
        "conv3": lin(64, 64),
        "gat1": gatp(64, 64),
        "gat2": gatp(64, 64),
        "linear2": lin(64, 128),
        "emb_linear": lin(512, 128),
        "linear3": lin(256, 1),
    }


if __name__ == "__main__":
    B, NC, NP = 2, 4, 4            # batch_size, num_cross, num_pieces -> 32 nodes
    N = B * NC * NP

    key = jax.random.PRNGKey(0)
    kx, ke, kp = jax.random.split(key, 3)
    x = jax.random.normal(kx, (N, 19), jnp.float32)        # data.x
    emb = jax.random.normal(ke, (B, 512), jnp.float32)     # emb input of emb_linear
    params = init_params(kp)

    fwd = jax.jit(gcn_emb_disc_forward, static_argnums=(3, 4, 5))
    out = jax.block_until_ready(fwd(x, emb, params, B, NC, NP))

    assert out.shape == (B, 1) and out.dtype == jnp.float32
    assert bool(jnp.all(jnp.isfinite(out)))
    assert bool(jnp.all((out >= 0.0) & (out <= 1.0)))

    ref = ref_forward(x, emb, params, B, NC, NP)
    err = float(jnp.max(jnp.abs(out - ref)))
    # bf16 matmul operands + approx reciprocal in the softmax -> small mismatch.
    assert err < 3e-2, f"mismatch vs reference: {err}"

    print("KERNEL_OK")
</pallas_src>

<mosaic_0001>
module attributes {stable_mosaic.version = 11 : i64} {
  func.func @gcn_emb_disc_kernel(%arg0: i32, %arg1: memref<1x32x19xf32, #tpu.memory_space<vmem>>, %arg2: memref<1x2x512xf32, #tpu.memory_space<vmem>>, %arg3: memref<32x32xbf16, #tpu.memory_space<vmem>>, %arg4: memref<19x32xbf16, #tpu.memory_space<vmem>>, %arg5: memref<1x32xf32, #tpu.memory_space<vmem>>, %arg6: memref<32x64xbf16, #tpu.memory_space<vmem>>, %arg7: memref<1x64xf32, #tpu.memory_space<vmem>>, %arg8: memref<64x64xbf16, #tpu.memory_space<vmem>>, %arg9: memref<1x64xf32, #tpu.memory_space<vmem>>, %arg10: memref<64x66xbf16, #tpu.memory_space<vmem>>, %arg11: memref<1x64xf32, #tpu.memory_space<vmem>>, %arg12: memref<64x66xbf16, #tpu.memory_space<vmem>>, %arg13: memref<1x64xf32, #tpu.memory_space<vmem>>, %arg14: memref<64x128xbf16, #tpu.memory_space<vmem>>, %arg15: memref<1x128xf32, #tpu.memory_space<vmem>>, %arg16: memref<512x128xbf16, #tpu.memory_space<vmem>>, %arg17: memref<1x128xf32, #tpu.memory_space<vmem>>, %arg18: memref<128x1xbf16, #tpu.memory_space<vmem>>, %arg19: memref<128x1xbf16, #tpu.memory_space<vmem>>, %arg20: memref<1x1xf32, #tpu.memory_space<vmem>>, %arg21: memref<1x2x1xf32, #tpu.memory_space<vmem>>) attributes {dimension_semantics = [#tpu.dimension_semantics<parallel>], iteration_bounds = array<i64: 1>, scalar_prefetch = 0 : i64, scratch_operands = 0 : i64, tpu.core_type = #tpu.core_type<tc>, window_params = [{transform_indices = @transform_0, window_bounds = array<i64: 1, 32, 19>}, {transform_indices = @transform_1, window_bounds = array<i64: 1, 2, 512>}, {pipeline_mode = #tpu.pipeline_mode<synchronous>, transform_indices = @transform_2, window_bounds = array<i64: 32, 32>}, {pipeline_mode = #tpu.pipeline_mode<synchronous>, transform_indices = @transform_3, window_bounds = array<i64: 19, 32>}, {pipeline_mode = #tpu.pipeline_mode<synchronous>, transform_indices = @transform_4, window_bounds = array<i64: 1, 32>}, {pipeline_mode = #tpu.pipeline_mode<synchronous>, transform_indices = @transform_5, window_bounds = array<i64: 32, 64>}, {pipeline_mode = #tpu.pipeline_mode<synchronous>, transform_indices = @transform_6, window_bounds = array<i64: 1, 64>}, {pipeline_mode = #tpu.pipeline_mode<synchronous>, transform_indices = @transform_7, window_bounds = array<i64: 64, 64>}, {pipeline_mode = #tpu.pipeline_mode<synchronous>, transform_indices = @transform_8, window_bounds = array<i64: 1, 64>}, {pipeline_mode = #tpu.pipeline_mode<synchronous>, transform_indices = @transform_9, window_bounds = array<i64: 64, 66>}, {pipeline_mode = #tpu.pipeline_mode<synchronous>, transform_indices = @transform_10, window_bounds = array<i64: 1, 64>}, {pipeline_mode = #tpu.pipeline_mode<synchronous>, transform_indices = @transform_11, window_bounds = array<i64: 64, 66>}, {pipeline_mode = #tpu.pipeline_mode<synchronous>, transform_indices = @transform_12, window_bounds = array<i64: 1, 64>}, {pipeline_mode = #tpu.pipeline_mode<synchronous>, transform_indices = @transform_13, window_bounds = array<i64: 64, 128>}, {pipeline_mode = #tpu.pipeline_mode<synchronous>, transform_indices = @transform_14, window_bounds = array<i64: 1, 128>}, {pipeline_mode = #tpu.pipeline_mode<synchronous>, transform_indices = @transform_15, window_bounds = array<i64: 512, 128>}, {pipeline_mode = #tpu.pipeline_mode<synchronous>, transform_indices = @transform_16, window_bounds = array<i64: 1, 128>}, {pipeline_mode = #tpu.pipeline_mode<synchronous>, transform_indices = @transform_17, window_bounds = array<i64: 128, 1>}, {pipeline_mode = #tpu.pipeline_mode<synchronous>, transform_indices = @transform_18, window_bounds = array<i64: 128, 1>}, {pipeline_mode = #tpu.pipeline_mode<synchronous>, transform_indices = @transform_19, window_bounds = array<i64: 1, 1>}, {transform_indices = @transform_20, window_bounds = array<i64: 1, 2, 1>}]} {
    %c0 = arith.constant 0 : index
    %c0_0 = arith.constant 0 : index
    %c0_1 = arith.constant 0 : index
    %0 = vector.load %arg1[%c0, %c0_0, %c0_1] : memref<1x32x19xf32, #tpu.memory_space<vmem>>, vector<1x32x19xf32>
    %1 = vector.shape_cast %0 : vector<1x32x19xf32> to vector<32x19xf32>
    %c0_2 = arith.constant 0 : index
    %c0_3 = arith.constant 0 : index
    %c0_4 = arith.constant 0 : index
    %2 = vector.load %arg2[%c0_2, %c0_3, %c0_4] : memref<1x2x512xf32, #tpu.memory_space<vmem>>, vector<1x2x512xf32>
    %3 = vector.shape_cast %2 : vector<1x2x512xf32> to vector<2x512xf32>
    %c0_5 = arith.constant 0 : index
    %c0_6 = arith.constant 0 : index
    %4 = vector.load %arg3[%c0_5, %c0_6] : memref<32x32xbf16, #tpu.memory_space<vmem>>, vector<32x32xbf16>
    %5 = arith.truncf %1 : vector<32x19xf32> to vector<32x19xbf16>
    %cst = arith.constant dense<0.000000e+00> : vector<32x19xf32>
    %6 = tpu.matmul %4, %5, %cst {dimension_numbers = #tpu.dot_dimension_numbers<[1], [0], [0], [1], [0, 0, 1, 1], [], []>} : vector<32x32xbf16>, vector<32x19xbf16>, vector<32x19xf32> -> vector<32x19xf32>
    %7 = arith.truncf %6 : vector<32x19xf32> to vector<32x19xbf16>
    %c0_7 = arith.constant 0 : index
    %c0_8 = arith.constant 0 : index
    %8 = vector.load %arg4[%c0_7, %c0_8] : memref<19x32xbf16, #tpu.memory_space<vmem>>, vector<19x32xbf16>
    %cst_9 = arith.constant dense<0.000000e+00> : vector<32x32xf32>
    %9 = tpu.matmul %7, %8, %cst_9 {dimension_numbers = #tpu.dot_dimension_numbers<[1], [0], [0], [1], [0, 0, 1, 1], [], []>} : vector<32x19xbf16>, vector<19x32xbf16>, vector<32x32xf32> -> vector<32x32xf32>
    %c0_10 = arith.constant 0 : index
    %c0_11 = arith.constant 0 : index
    %10 = vector.load %arg5[%c0_10, %c0_11] : memref<1x32xf32, #tpu.memory_space<vmem>>, vector<1x32xf32>
    %11 = vector.broadcast %10 : vector<1x32xf32> to vector<32x32xf32>
    %12 = arith.addf %9, %11 : vector<32x32xf32>
    %cst_12 = arith.constant 0.000000e+00 : f32
    %13 = vector.broadcast %cst_12 : f32 to vector<32x32xf32>
    %14 = arith.maximumf %12, %13 : vector<32x32xf32>
    %c0_13 = arith.constant 0 : index
    %c0_14 = arith.constant 0 : index
    %15 = vector.load %arg3[%c0_13, %c0_14] : memref<32x32xbf16, #tpu.memory_space<vmem>>, vector<32x32xbf16>
    %16 = arith.truncf %14 : vector<32x32xf32> to vector<32x32xbf16>
    %cst_15 = arith.constant dense<0.000000e+00> : vector<32x32xf32>
    %17 = tpu.matmul %15, %16, %cst_15 {dimension_numbers = #tpu.dot_dimension_numbers<[1], [0], [0], [1], [0, 0, 1, 1], [], []>} : vector<32x32xbf16>, vector<32x32xbf16>, vector<32x32xf32> -> vector<32x32xf32>
    %18 = arith.truncf %17 : vector<32x32xf32> to vector<32x32xbf16>
    %c0_16 = arith.constant 0 : index
    %c0_17 = arith.constant 0 : index
    %19 = vector.load %arg6[%c0_16, %c0_17] : memref<32x64xbf16, #tpu.memory_space<vmem>>, vector<32x64xbf16>
    %cst_18 = arith.constant dense<0.000000e+00> : vector<32x64xf32>
    %20 = tpu.matmul %18, %19, %cst_18 {dimension_numbers = #tpu.dot_dimension_numbers<[1], [0], [0], [1], [0, 0, 1, 1], [], []>} : vector<32x32xbf16>, vector<32x64xbf16>, vector<32x64xf32> -> vector<32x64xf32>
    %c0_19 = arith.constant 0 : index
    %c0_20 = arith.constant 0 : index
    %21 = vector.load %arg7[%c0_19, %c0_20] : memref<1x64xf32, #tpu.memory_space<vmem>>, vector<1x64xf32>
    %22 = vector.broadcast %21 : vector<1x64xf32> to vector<32x64xf32>
    %23 = arith.addf %20, %22 : vector<32x64xf32>
    %cst_21 = arith.constant 0.000000e+00 : f32
    %24 = vector.broadcast %cst_21 : f32 to vector<32x64xf32>
    %25 = arith.cmpf ogt, %23, %24 : vector<32x64xf32>
    %cst_22 = arith.constant 0.00999999977 : f32
    %26 = vector.broadcast %cst_22 : f32 to vector<32x64xf32>
    %27 = arith.mulf %26, %23 : vector<32x64xf32>
    %28 = arith.select %25, %23, %27 : vector<32x64xi1>, vector<32x64xf32>
    %c0_23 = arith.constant 0 : index
    %c0_24 = arith.constant 0 : index
    %29 = vector.load %arg3[%c0_23, %c0_24] : memref<32x32xbf16, #tpu.memory_space<vmem>>, vector<32x32xbf16>
    %30 = arith.truncf %28 : vector<32x64xf32> to vector<32x64xbf16>
    %cst_25 = arith.constant dense<0.000000e+00> : vector<32x64xf32>
    %31 = tpu.matmul %29, %30, %cst_25 {dimension_numbers = #tpu.dot_dimension_numbers<[1], [0], [0], [1], [0, 0, 1, 1], [], []>} : vector<32x32xbf16>, vector<32x64xbf16>, vector<32x64xf32> -> vector<32x64xf32>
    %32 = arith.truncf %31 : vector<32x64xf32> to vector<32x64xbf16>
    %c0_26 = arith.constant 0 : index
    %c0_27 = arith.constant 0 : index
    %33 = vector.load %arg8[%c0_26, %c0_27] : memref<64x64xbf16, #tpu.memory_space<vmem>>, vector<64x64xbf16>
    %cst_28 = arith.constant dense<0.000000e+00> : vector<32x64xf32>
    %34 = tpu.matmul %32, %33, %cst_28 {dimension_numbers = #tpu.dot_dimension_numbers<[1], [0], [0], [1], [0, 0, 1, 1], [], []>} : vector<32x64xbf16>, vector<64x64xbf16>, vector<32x64xf32> -> vector<32x64xf32>
    %c0_29 = arith.constant 0 : index
    %c0_30 = arith.constant 0 : index
    %35 = vector.load %arg9[%c0_29, %c0_30] : memref<1x64xf32, #tpu.memory_space<vmem>>, vector<1x64xf32>
    %36 = vector.broadcast %35 : vector<1x64xf32> to vector<32x64xf32>
    %37 = arith.addf %34, %36 : vector<32x64xf32>
    %cst_31 = arith.constant 0.000000e+00 : f32
    %38 = vector.broadcast %cst_31 : f32 to vector<32x64xf32>
    %39 = arith.cmpf ogt, %37, %38 : vector<32x64xf32>
    %cst_32 = arith.constant 0.00999999977 : f32
    %40 = vector.broadcast %cst_32 : f32 to vector<32x64xf32>
    %41 = arith.mulf %40, %37 : vector<32x64xf32>
    %42 = arith.select %39, %37, %41 : vector<32x64xi1>, vector<32x64xf32>
    %43 = arith.truncf %42 : vector<32x64xf32> to vector<32x64xbf16>
    %c0_33 = arith.constant 0 : index
    %c0_34 = arith.constant 0 : index
    %44 = vector.load %arg10[%c0_33, %c0_34] : memref<64x66xbf16, #tpu.memory_space<vmem>>, vector<64x66xbf16>
    %cst_35 = arith.constant dense<0.000000e+00> : vector<32x66xf32>
    %45 = tpu.matmul %43, %44, %cst_35 {dimension_numbers = #tpu.dot_dimension_numbers<[1], [0], [0], [1], [0, 0, 1, 1], [], []>} : vector<32x64xbf16>, vector<64x66xbf16>, vector<32x66xf32> -> vector<32x66xf32>
    %46 = vector.shape_cast %45 : vector<32x66xf32> to vector<8x4x66xf32>
    %47 = vector.extract_strided_slice %46 {offsets = [0, 0, 0], sizes = [8, 4, 64], strides = [1, 1, 1]} : vector<8x4x66xf32> to vector<8x4x64xf32>
    %48 = vector.extract_strided_slice %46 {offsets = [0, 0, 64], sizes = [8, 4, 1], strides = [1, 1, 1]} : vector<8x4x66xf32> to vector<8x4x1xf32>
    %49 = vector.shape_cast %48 : vector<8x4x1xf32> to vector<8x4xf32>
    %50 = vector.extract_strided_slice %46 {offsets = [0, 0, 65], sizes = [8, 4, 1], strides = [1, 1, 1]} : vector<8x4x66xf32> to vector<8x4x1xf32>
    %51 = vector.shape_cast %50 : vector<8x4x1xf32> to vector<8x4xf32>
    %52 = vector.shape_cast %51 : vector<8x4xf32> to vector<8x4x1xf32>
    %53 = vector.shape_cast %49 : vector<8x4xf32> to vector<8x1x4xf32>
    %54 = vector.broadcast %52 : vector<8x4x1xf32> to vector<8x4x4xf32>
    %55 = vector.broadcast %53 : vector<8x1x4xf32> to vector<8x4x4xf32>
    %56 = arith.addf %54, %55 : vector<8x4x4xf32>
    %cst_36 = arith.constant 0.000000e+00 : f32
    %57 = vector.broadcast %cst_36 : f32 to vector<8x4x4xf32>
    %58 = arith.cmpf ogt, %56, %57 : vector<8x4x4xf32>
    %cst_37 = arith.constant 2.000000e-01 : f32
    %59 = vector.broadcast %cst_37 : f32 to vector<8x4x4xf32>
    %60 = arith.mulf %59, %56 : vector<8x4x4xf32>
    %61 = arith.select %58, %56, %60 : vector<8x4x4xi1>, vector<8x4x4xf32>
    %cst_38 = arith.constant dense<0xFF800000> : vector<8x4xf32>
    %62 = vector.multi_reduction <maximumf>, %61, %cst_38 [2] : vector<8x4x4xf32> to vector<8x4xf32>
    %63 = vector.shape_cast %62 : vector<8x4xf32> to vector<8x4x1xf32>
    %64 = vector.broadcast %63 : vector<8x4x1xf32> to vector<8x4x4xf32>
    %65 = arith.subf %61, %64 : vector<8x4x4xf32>
    %66 = math.exp %65 : vector<8x4x4xf32>
    %cst_39 = arith.constant dense<0.000000e+00> : vector<8x4xf32>
    %67 = vector.multi_reduction <add>, %66, %cst_39 [2] : vector<8x4x4xf32> to vector<8x4xf32>
    %68 = vector.shape_cast %67 : vector<8x4xf32> to vector<8x4x1xf32>
    %69 = tpu.reciprocal %68 {approx = true} : vector<8x4x1xf32> -> vector<8x4x1xf32>
    %70 = vector.broadcast %69 : vector<8x4x1xf32> to vector<8x4x4xf32>
    %71 = arith.mulf %66, %70 : vector<8x4x4xf32>
    %cst_40 = arith.constant dense<0.000000e+00> : vector<8x4xf32>
    %72 = vector.multi_reduction <add>, %71, %cst_40 [1] : vector<8x4x4xf32> to vector<8x4xf32>
    %cst_41 = arith.constant 4.000000e+00 : f32
    %73 = vector.broadcast %cst_41 : f32 to vector<8x4xf32>
    %74 = arith.divf %72, %73 : vector<8x4xf32>
    %75 = vector.extract_strided_slice %74 {offsets = [0, 0], sizes = [8, 1], strides = [1, 1]} : vector<8x4xf32> to vector<8x1xf32>
    %76 = vector.extract_strided_slice %47 {offsets = [0, 0, 0], sizes = [8, 1, 64], strides = [1, 1, 1]} : vector<8x4x64xf32> to vector<8x1x64xf32>
    %77 = vector.shape_cast %76 : vector<8x1x64xf32> to vector<8x64xf32>
    %78 = vector.broadcast %75 : vector<8x1xf32> to vector<8x64xf32>
    %79 = arith.mulf %78, %77 : vector<8x64xf32>
    %80 = vector.extract_strided_slice %74 {offsets = [0, 1], sizes = [8, 1], strides = [1, 1]} : vector<8x4xf32> to vector<8x1xf32>
    %81 = vector.extract_strided_slice %47 {offsets = [0, 1, 0], sizes = [8, 1, 64], strides = [1, 1, 1]} : vector<8x4x64xf32> to vector<8x1x64xf32>
    %82 = vector.shape_cast %81 : vector<8x1x64xf32> to vector<8x64xf32>
    %83 = vector.broadcast %80 : vector<8x1xf32> to vector<8x64xf32>
    %84 = arith.mulf %83, %82 : vector<8x64xf32>
    %85 = arith.addf %79, %84 : vector<8x64xf32>
    %86 = vector.extract_strided_slice %74 {offsets = [0, 2], sizes = [8, 1], strides = [1, 1]} : vector<8x4xf32> to vector<8x1xf32>
    %87 = vector.extract_strided_slice %47 {offsets = [0, 2, 0], sizes = [8, 1, 64], strides = [1, 1, 1]} : vector<8x4x64xf32> to vector<8x1x64xf32>
    %88 = vector.shape_cast %87 : vector<8x1x64xf32> to vector<8x64xf32>
    %89 = vector.broadcast %86 : vector<8x1xf32> to vector<8x64xf32>
    %90 = arith.mulf %89, %88 : vector<8x64xf32>
    %91 = arith.addf %85, %90 : vector<8x64xf32>
    %92 = vector.extract_strided_slice %74 {offsets = [0, 3], sizes = [8, 1], strides = [1, 1]} : vector<8x4xf32> to vector<8x1xf32>
    %93 = vector.extract_strided_slice %47 {offsets = [0, 3, 0], sizes = [8, 1, 64], strides = [1, 1, 1]} : vector<8x4x64xf32> to vector<8x1x64xf32>
    %94 = vector.shape_cast %93 : vector<8x1x64xf32> to vector<8x64xf32>
    %95 = vector.broadcast %92 : vector<8x1xf32> to vector<8x64xf32>
    %96 = arith.mulf %95, %94 : vector<8x64xf32>
    %97 = arith.addf %91, %96 : vector<8x64xf32>
    %c0_42 = arith.constant 0 : index
    %c0_43 = arith.constant 0 : index
    %98 = vector.load %arg11[%c0_42, %c0_43] : memref<1x64xf32, #tpu.memory_space<vmem>>, vector<1x64xf32>
    %99 = vector.broadcast %98 : vector<1x64xf32> to vector<8x64xf32>
    %100 = arith.addf %97, %99 : vector<8x64xf32>
    %101 = arith.truncf %100 : vector<8x64xf32> to vector<8x64xbf16>
    %c0_44 = arith.constant 0 : index
    %c0_45 = arith.constant 0 : index
    %102 = vector.load %arg12[%c0_44, %c0_45] : memref<64x66xbf16, #tpu.memory_space<vmem>>, vector<64x66xbf16>
    %cst_46 = arith.constant dense<0.000000e+00> : vector<8x66xf32>
    %103 = tpu.matmul %101, %102, %cst_46 {dimension_numbers = #tpu.dot_dimension_numbers<[1], [0], [0], [1], [0, 0, 1, 1], [], []>} : vector<8x64xbf16>, vector<64x66xbf16>, vector<8x66xf32> -> vector<8x66xf32>
    %104 = vector.shape_cast %103 : vector<8x66xf32> to vector<2x4x66xf32>
    %105 = vector.extract_strided_slice %104 {offsets = [0, 0, 0], sizes = [2, 4, 64], strides = [1, 1, 1]} : vector<2x4x66xf32> to vector<2x4x64xf32>
    %106 = vector.extract_strided_slice %104 {offsets = [0, 0, 64], sizes = [2, 4, 1], strides = [1, 1, 1]} : vector<2x4x66xf32> to vector<2x4x1xf32>
    %107 = vector.shape_cast %106 : vector<2x4x1xf32> to vector<2x4xf32>
    %108 = vector.extract_strided_slice %104 {offsets = [0, 0, 65], sizes = [2, 4, 1], strides = [1, 1, 1]} : vector<2x4x66xf32> to vector<2x4x1xf32>
    %109 = vector.shape_cast %108 : vector<2x4x1xf32> to vector<2x4xf32>
    %110 = vector.shape_cast %109 : vector<2x4xf32> to vector<2x4x1xf32>
    %111 = vector.shape_cast %107 : vector<2x4xf32> to vector<2x1x4xf32>
    %112 = vector.broadcast %110 : vector<2x4x1xf32> to vector<2x4x4xf32>
    %113 = vector.broadcast %111 : vector<2x1x4xf32> to vector<2x4x4xf32>
    %114 = arith.addf %112, %113 : vector<2x4x4xf32>
    %cst_47 = arith.constant 0.000000e+00 : f32
    %115 = vector.broadcast %cst_47 : f32 to vector<2x4x4xf32>
    %116 = arith.cmpf ogt, %114, %115 : vector<2x4x4xf32>
    %cst_48 = arith.constant 2.000000e-01 : f32
    %117 = vector.broadcast %cst_48 : f32 to vector<2x4x4xf32>
    %118 = arith.mulf %117, %114 : vector<2x4x4xf32>
    %119 = arith.select %116, %114, %118 : vector<2x4x4xi1>, vector<2x4x4xf32>
    %cst_49 = arith.constant dense<0xFF800000> : vector<2x4xf32>
    %120 = vector.multi_reduction <maximumf>, %119, %cst_49 [2] : vector<2x4x4xf32> to vector<2x4xf32>
    %121 = vector.shape_cast %120 : vector<2x4xf32> to vector<2x4x1xf32>
    %122 = vector.broadcast %121 : vector<2x4x1xf32> to vector<2x4x4xf32>
    %123 = arith.subf %119, %122 : vector<2x4x4xf32>
    %124 = math.exp %123 : vector<2x4x4xf32>
    %cst_50 = arith.constant dense<0.000000e+00> : vector<2x4xf32>
    %125 = vector.multi_reduction <add>, %124, %cst_50 [2] : vector<2x4x4xf32> to vector<2x4xf32>
    %126 = vector.shape_cast %125 : vector<2x4xf32> to vector<2x4x1xf32>
    %127 = tpu.reciprocal %126 {approx = true} : vector<2x4x1xf32> -> vector<2x4x1xf32>
    %128 = vector.broadcast %127 : vector<2x4x1xf32> to vector<2x4x4xf32>
    %129 = arith.mulf %124, %128 : vector<2x4x4xf32>
    %cst_51 = arith.constant dense<0.000000e+00> : vector<2x4xf32>
    %130 = vector.multi_reduction <add>, %129, %cst_51 [1] : vector<2x4x4xf32> to vector<2x4xf32>
    %cst_52 = arith.constant 4.000000e+00 : f32
    %131 = vector.broadcast %cst_52 : f32 to vector<2x4xf32>
    %132 = arith.divf %130, %131 : vector<2x4xf32>
    %133 = vector.extract_strided_slice %132 {offsets = [0, 0], sizes = [2, 1], strides = [1, 1]} : vector<2x4xf32> to vector<2x1xf32>
    %134 = vector.extract_strided_slice %105 {offsets = [0, 0, 0], sizes = [2, 1, 64], strides = [1, 1, 1]} : vector<2x4x64xf32> to vector<2x1x64xf32>
    %135 = vector.shape_cast %134 : vector<2x1x64xf32> to vector<2x64xf32>
    %136 = vector.broadcast %133 : vector<2x1xf32> to vector<2x64xf32>
    %137 = arith.mulf %136, %135 : vector<2x64xf32>
    %138 = vector.extract_strided_slice %132 {offsets = [0, 1], sizes = [2, 1], strides = [1, 1]} : vector<2x4xf32> to vector<2x1xf32>
    %139 = vector.extract_strided_slice %105 {offsets = [0, 1, 0], sizes = [2, 1, 64], strides = [1, 1, 1]} : vector<2x4x64xf32> to vector<2x1x64xf32>
    %140 = vector.shape_cast %139 : vector<2x1x64xf32> to vector<2x64xf32>
    %141 = vector.broadcast %138 : vector<2x1xf32> to vector<2x64xf32>
    %142 = arith.mulf %141, %140 : vector<2x64xf32>
    %143 = arith.addf %137, %142 : vector<2x64xf32>
    %144 = vector.extract_strided_slice %132 {offsets = [0, 2], sizes = [2, 1], strides = [1, 1]} : vector<2x4xf32> to vector<2x1xf32>
    %145 = vector.extract_strided_slice %105 {offsets = [0, 2, 0], sizes = [2, 1, 64], strides = [1, 1, 1]} : vector<2x4x64xf32> to vector<2x1x64xf32>
    %146 = vector.shape_cast %145 : vector<2x1x64xf32> to vector<2x64xf32>
    %147 = vector.broadcast %144 : vector<2x1xf32> to vector<2x64xf32>
    %148 = arith.mulf %147, %146 : vector<2x64xf32>
    %149 = arith.addf %143, %148 : vector<2x64xf32>
    %150 = vector.extract_strided_slice %132 {offsets = [0, 3], sizes = [2, 1], strides = [1, 1]} : vector<2x4xf32> to vector<2x1xf32>
    %151 = vector.extract_strided_slice %105 {offsets = [0, 3, 0], sizes = [2, 1, 64], strides = [1, 1, 1]} : vector<2x4x64xf32> to vector<2x1x64xf32>
    %152 = vector.shape_cast %151 : vector<2x1x64xf32> to vector<2x64xf32>
    %153 = vector.broadcast %150 : vector<2x1xf32> to vector<2x64xf32>
    %154 = arith.mulf %153, %152 : vector<2x64xf32>
    %155 = arith.addf %149, %154 : vector<2x64xf32>
    %c0_53 = arith.constant 0 : index
    %c0_54 = arith.constant 0 : index
    %156 = vector.load %arg13[%c0_53, %c0_54] : memref<1x64xf32, #tpu.memory_space<vmem>>, vector<1x64xf32>
    %157 = vector.broadcast %156 : vector<1x64xf32> to vector<2x64xf32>
    %158 = arith.addf %155, %157 : vector<2x64xf32>
    %159 = arith.truncf %158 : vector<2x64xf32> to vector<2x64xbf16>
    %c0_55 = arith.constant 0 : index
    %c0_56 = arith.constant 0 : index
    %160 = vector.load %arg14[%c0_55, %c0_56] : memref<64x128xbf16, #tpu.memory_space<vmem>>, vector<64x128xbf16>
    %cst_57 = arith.constant dense<0.000000e+00> : vector<2x128xf32>
    %161 = tpu.matmul %159, %160, %cst_57 {dimension_numbers = #tpu.dot_dimension_numbers<[1], [0], [0], [1], [0, 0, 1, 1], [], []>} : vector<2x64xbf16>, vector<64x128xbf16>, vector<2x128xf32> -> vector<2x128xf32>
    %c0_58 = arith.constant 0 : index
    %c0_59 = arith.constant 0 : index
    %162 = vector.load %arg15[%c0_58, %c0_59] : memref<1x128xf32, #tpu.memory_space<vmem>>, vector<1x128xf32>
    %163 = vector.broadcast %162 : vector<1x128xf32> to vector<2x128xf32>
    %164 = arith.addf %161, %163 : vector<2x128xf32>
    %cst_60 = arith.constant 0.000000e+00 : f32
    %165 = vector.broadcast %cst_60 : f32 to vector<2x128xf32>
    %166 = arith.cmpf ogt, %164, %165 : vector<2x128xf32>
    %cst_61 = arith.constant 0.00999999977 : f32
    %167 = vector.broadcast %cst_61 : f32 to vector<2x128xf32>
    %168 = arith.mulf %167, %164 : vector<2x128xf32>
    %169 = arith.select %166, %164, %168 : vector<2x128xi1>, vector<2x128xf32>
    %170 = arith.truncf %3 : vector<2x512xf32> to vector<2x512xbf16>
    %c0_62 = arith.constant 0 : index
    %c0_63 = arith.constant 0 : index
    %171 = vector.load %arg16[%c0_62, %c0_63] : memref<512x128xbf16, #tpu.memory_space<vmem>>, vector<512x128xbf16>
    %cst_64 = arith.constant dense<0.000000e+00> : vector<2x128xf32>
    %172 = tpu.matmul %170, %171, %cst_64 {dimension_numbers = #tpu.dot_dimension_numbers<[1], [0], [0], [1], [0, 0, 1, 1], [], []>} : vector<2x512xbf16>, vector<512x128xbf16>, vector<2x128xf32> -> vector<2x128xf32>
    %c0_65 = arith.constant 0 : index
    %c0_66 = arith.constant 0 : index
    %173 = vector.load %arg17[%c0_65, %c0_66] : memref<1x128xf32, #tpu.memory_space<vmem>>, vector<1x128xf32>
    %174 = vector.broadcast %173 : vector<1x128xf32> to vector<2x128xf32>
    %175 = arith.addf %172, %174 : vector<2x128xf32>
    %cst_67 = arith.constant 0.000000e+00 : f32
    %176 = vector.broadcast %cst_67 : f32 to vector<2x128xf32>
    %177 = arith.cmpf ogt, %175, %176 : vector<2x128xf32>
    %cst_68 = arith.constant 0.00999999977 : f32
    %178 = vector.broadcast %cst_68 : f32 to vector<2x128xf32>
    %179 = arith.mulf %178, %175 : vector<2x128xf32>
    %180 = arith.select %177, %175, %179 : vector<2x128xi1>, vector<2x128xf32>
    %181 = arith.truncf %169 : vector<2x128xf32> to vector<2x128xbf16>
    %c0_69 = arith.constant 0 : index
    %c0_70 = arith.constant 0 : index
    %182 = vector.load %arg18[%c0_69, %c0_70] : memref<128x1xbf16, #tpu.memory_space<vmem>>, vector<128x1xbf16>
    %cst_71 = arith.constant dense<0.000000e+00> : vector<2x1xf32>
    %183 = tpu.matmul %181, %182, %cst_71 {dimension_numbers = #tpu.dot_dimension_numbers<[1], [0], [0], [1], [0, 0, 1, 1], [], []>} : vector<2x128xbf16>, vector<128x1xbf16>, vector<2x1xf32> -> vector<2x1xf32>
    %184 = arith.truncf %180 : vector<2x128xf32> to vector<2x128xbf16>
    %c0_72 = arith.constant 0 : index
    %c0_73 = arith.constant 0 : index
    %185 = vector.load %arg19[%c0_72, %c0_73] : memref<128x1xbf16, #tpu.memory_space<vmem>>, vector<128x1xbf16>
    %cst_74 = arith.constant dense<0.000000e+00> : vector<2x1xf32>
    %186 = tpu.matmul %184, %185, %cst_74 {dimension_numbers = #tpu.dot_dimension_numbers<[1], [0], [0], [1], [0, 0, 1, 1], [], []>} : vector<2x128xbf16>, vector<128x1xbf16>, vector<2x1xf32> -> vector<2x1xf32>
    %187 = arith.addf %183, %186 : vector<2x1xf32>
    %c0_75 = arith.constant 0 : index
    %c0_76 = arith.constant 0 : index
    %188 = vector.load %arg20[%c0_75, %c0_76] : memref<1x1xf32, #tpu.memory_space<vmem>>, vector<1x1xf32>
    %189 = vector.broadcast %188 : vector<1x1xf32> to vector<2x1xf32>
    %190 = arith.addf %187, %189 : vector<2x1xf32>
    %cst_77 = arith.constant 0.000000e+00 : f32
    %191 = vector.broadcast %cst_77 : f32 to vector<2x1xf32>
    %192 = arith.subf %191, %190 : vector<2x1xf32>
    %193 = math.exp %192 : vector<2x1xf32>
    %cst_78 = arith.constant 1.000000e+00 : f32
    %194 = vector.broadcast %cst_78 : f32 to vector<2x1xf32>
    %195 = arith.addf %194, %193 : vector<2x1xf32>
    %cst_79 = arith.constant 1.000000e+00 : f32
    %196 = vector.broadcast %cst_79 : f32 to vector<2x1xf32>
    %197 = arith.divf %196, %195 : vector<2x1xf32>
    %198 = vector.shape_cast %197 : vector<2x1xf32> to vector<1x2x1xf32>
    %c0_80 = arith.constant 0 : index
    %c0_81 = arith.constant 0 : index
    %c0_82 = arith.constant 0 : index
    %199 = vector.load %arg21[%c0_80, %c0_81, %c0_82] : memref<1x2x1xf32, #tpu.memory_space<vmem>>, vector<1x2x1xf32>
    tpu.vector_store %arg21[%c0_80, %c0_81, %c0_82], %198 {strides = array<i32>} : memref<1x2x1xf32, #tpu.memory_space<vmem>>, vector<1x2x1xf32>,
    return
  }
  func.func @transform_0(%arg0: i32) -> (i32, i32, i32) {
    %c0_i32 = arith.constant 0 : i32
    %c0_i32_0 = arith.constant 0 : i32
    %c0_i32_1 = arith.constant 0 : i32
    return %arg0, %c0_i32, %c0_i32_0 : i32, i32, i32
  }
  func.func @transform_1(%arg0: i32) -> (i32, i32, i32) {
    %c0_i32 = arith.constant 0 : i32
    %c0_i32_0 = arith.constant 0 : i32
    %c0_i32_1 = arith.constant 0 : i32
    return %arg0, %c0_i32, %c0_i32_0 : i32, i32, i32
  }
  func.func @transform_2(%arg0: i32) -> (i32, i32) {
    %c0_i32 = arith.constant 0 : i32
    %c0_i32_0 = arith.constant 0 : i32
    %c0_i32_1 = arith.constant 0 : i32
    return %c0_i32, %c0_i32_0 : i32, i32
  }
  func.func @transform_3(%arg0: i32) -> (i32, i32) {
    %c0_i32 = arith.constant 0 : i32
    %c0_i32_0 = arith.constant 0 : i32
    %c0_i32_1 = arith.constant 0 : i32
    return %c0_i32, %c0_i32_0 : i32, i32
  }
  func.func @transform_4(%arg0: i32) -> (i32, i32) {
    %c0_i32 = arith.constant 0 : i32
    %c0_i32_0 = arith.constant 0 : i32
    %c0_i32_1 = arith.constant 0 : i32
    return %c0_i32, %c0_i32_0 : i32, i32
  }
  func.func @transform_5(%arg0: i32) -> (i32, i32) {
    %c0_i32 = arith.constant 0 : i32
    %c0_i32_0 = arith.constant 0 : i32
    %c0_i32_1 = arith.constant 0 : i32
    return %c0_i32, %c0_i32_0 : i32, i32
  }
  func.func @transform_6(%arg0: i32) -> (i32, i32) {
    %c0_i32 = arith.constant 0 : i32
    %c0_i32_0 = arith.constant 0 : i32
    %c0_i32_1 = arith.constant 0 : i32
    return %c0_i32, %c0_i32_0 : i32, i32
  }
  func.func @transform_7(%arg0: i32) -> (i32, i32) {
    %c0_i32 = arith.constant 0 : i32
    %c0_i32_0 = arith.constant 0 : i32
    %c0_i32_1 = arith.constant 0 : i32
    return %c0_i32, %c0_i32_0 : i32, i32
  }
  func.func @transform_8(%arg0: i32) -> (i32, i32) {
    %c0_i32 = arith.constant 0 : i32
    %c0_i32_0 = arith.constant 0 : i32
    %c0_i32_1 = arith.constant 0 : i32
    return %c0_i32, %c0_i32_0 : i32, i32
  }
  func.func @transform_9(%arg0: i32) -> (i32, i32) {
    %c0_i32 = arith.constant 0 : i32
    %c0_i32_0 = arith.constant 0 : i32
    %c0_i32_1 = arith.constant 0 : i32
    return %c0_i32, %c0_i32_0 : i32, i32
  }
  func.func @transform_10(%arg0: i32) -> (i32, i32) {
    %c0_i32 = arith.constant 0 : i32
    %c0_i32_0 = arith.constant 0 : i32
    %c0_i32_1 = arith.constant 0 : i32
    return %c0_i32, %c0_i32_0 : i32, i32
  }
  func.func @transform_11(%arg0: i32) -> (i32, i32) {
    %c0_i32 = arith.constant 0 : i32
    %c0_i32_0 = arith.constant 0 : i32
    %c0_i32_1 = arith.constant 0 : i32
    return %c0_i32, %c0_i32_0 : i32, i32
  }
  func.func @transform_12(%arg0: i32) -> (i32, i32) {
    %c0_i32 = arith.constant 0 : i32
    %c0_i32_0 = arith.constant 0 : i32
    %c0_i32_1 = arith.constant 0 : i32
    return %c0_i32, %c0_i32_0 : i32, i32
  }
  func.func @transform_13(%arg0: i32) -> (i32, i32) {
    %c0_i32 = arith.constant 0 : i32
    %c0_i32_0 = arith.constant 0 : i32
    %c0_i32_1 = arith.constant 0 : i32
    return %c0_i32, %c0_i32_0 : i32, i32
  }
  func.func @transform_14(%arg0: i32) -> (i32, i32) {
    %c0_i32 = arith.constant 0 : i32
    %c0_i32_0 = arith.constant 0 : i32
    %c0_i32_1 = arith.constant 0 : i32
    return %c0_i32, %c0_i32_0 : i32, i32
  }
  func.func @transform_15(%arg0: i32) -> (i32, i32) {
    %c0_i32 = arith.constant 0 : i32
    %c0_i32_0 = arith.constant 0 : i32
    %c0_i32_1 = arith.constant 0 : i32
    return %c0_i32, %c0_i32_0 : i32, i32
  }
  func.func @transform_16(%arg0: i32) -> (i32, i32) {
    %c0_i32 = arith.constant 0 : i32
    %c0_i32_0 = arith.constant 0 : i32
    %c0_i32_1 = arith.constant 0 : i32
    return %c0_i32, %c0_i32_0 : i32, i32
  }
  func.func @transform_17(%arg0: i32) -> (i32, i32) {
    %c0_i32 = arith.constant 0 : i32
    %c0_i32_0 = arith.constant 0 : i32
    %c0_i32_1 = arith.constant 0 : i32
    return %c0_i32, %c0_i32_0 : i32, i32
  }
  func.func @transform_18(%arg0: i32) -> (i32, i32) {
    %c0_i32 = arith.constant 0 : i32
    %c0_i32_0 = arith.constant 0 : i32
    %c0_i32_1 = arith.constant 0 : i32
    return %c0_i32, %c0_i32_0 : i32, i32
  }
  func.func @transform_19(%arg0: i32) -> (i32, i32) {
    %c0_i32 = arith.constant 0 : i32
    %c0_i32_0 = arith.constant 0 : i32
    %c0_i32_1 = arith.constant 0 : i32
    return %c0_i32, %c0_i32_0 : i32, i32
  }
  func.func @transform_20(%arg0: i32) -> (i32, i32, i32) {
    %c0_i32 = arith.constant 0 : i32
    %c0_i32_0 = arith.constant 0 : i32
    %c0_i32_1 = arith.constant 0 : i32
    return %arg0, %c0_i32, %c0_i32_0 : i32, i32, i32
  }
}

</mosaic_0001>

<llo_original>
// kernel: gcn_emb_disc_forward.1
$region0: #{gcn_emb_disc_forward.1}
  #allocation0 [shape = 'u32[]', space=smem, size = 0x4, offset = 0x4, fixed_abs, tag = 'smem constant byte address 0x4 - core index']
  #allocation1 [shape = 'u32[72,128]{1,0:T(1,128)}', space=vmem, size = 0x9000, scoped, tag = 'internal scratch']
  #allocation2 [shape = 'f32[1,1]{1,0:T(1,128)S(1)}', space=vmem, size = 0x200, scoped, tag = 'scoped memory for gcn_emb_disc_forward.1']
  %s0 = inlined_call_operand.vmem [shape: f32[1,32,19], index: 0, kind: input, shape index: {}]
  %s1 = inlined_call_operand.vmem [shape: f32[1,2,512], index: 1, kind: input, shape index: {}]
  %s2 = inlined_call_operand.vmem [shape: bf16[32,32], index: 2, kind: input, shape index: {}]
  %s3 = inlined_call_operand.vmem [shape: bf16[19,32], index: 3, kind: input, shape index: {}]
  %s4 = inlined_call_operand.vmem [shape: f32[1,32], index: 4, kind: input, shape index: {}]
  %s5 = inlined_call_operand.vmem [shape: bf16[32,64], index: 5, kind: input, shape index: {}]
  %s6 = inlined_call_operand.vmem [shape: f32[1,64], index: 6, kind: input, shape index: {}]
  %s7 = inlined_call_operand.vmem [shape: bf16[64,64], index: 7, kind: input, shape index: {}]
  %s8 = inlined_call_operand.vmem [shape: f32[1,64], index: 8, kind: input, shape index: {}]
  %s9 = inlined_call_operand.vmem [shape: bf16[64,66], index: 9, kind: input, shape index: {}]
  %s10 = inlined_call_operand.vmem [shape: f32[1,64], index: 10, kind: input, shape index: {}]
  %s11 = inlined_call_operand.vmem [shape: bf16[64,66], index: 11, kind: input, shape index: {}]
  %s12 = inlined_call_operand.vmem [shape: f32[1,64], index: 12, kind: input, shape index: {}]
  %s13 = inlined_call_operand.vmem [shape: bf16[64,128], index: 13, kind: input, shape index: {}]
  %s14 = inlined_call_operand.vmem [shape: f32[1,128], index: 14, kind: input, shape index: {}]
  %s15 = inlined_call_operand.vmem [shape: bf16[512,128], index: 15, kind: input, shape index: {}]
  %s16 = inlined_call_operand.vmem [shape: f32[1,128], index: 16, kind: input, shape index: {}]
  %s17 = inlined_call_operand.vmem [shape: bf16[128,1], index: 17, kind: input, shape index: {}]
  %s18 = inlined_call_operand.vmem [shape: bf16[128,1], index: 18, kind: input, shape index: {}]
  %s19 = inlined_call_operand.<no memory space> [shape: f32[1,1], index: 19, kind: input, shape index: {}]
  %s20 = inlined_call_operand.vmem [shape: f32[1,2,1], index: 20, kind: output, shape index: {}]
  %s21 = sld [smem:[#allocation0]]
  $region90: #{gcn_emb_disc_forward.1} parent=0
    _
  %s23 = ssub.s32 1, %s21
  %s24 = scalar_select 0, %s23, %s21
  %v25 = vstv %s19
  %26 = vst [vmem:[#allocation2] sm:$0x1] %v25
  // Predicated region
  $region2: #{gcn_emb_disc_forward.1} parent=0 // pred_check
    _
  $region3: #{gcn_emb_disc_forward.1} parent=0 // pred_check_branch
    %28 = sbr.rel (0) target = $region5
  $region4: #{gcn_emb_disc_forward.1} parent=0 // pred_region
    _
  $region5: #{gcn_emb_disc_forward.1} parent=0 // pred_fallthru
    _
  // Predicated region
  $region6: #{gcn_emb_disc_forward.1} parent=0 // pred_check
    _
  $region7: #{gcn_emb_disc_forward.1} parent=0 // pred_check_branch
    %30 = sbr.rel (0) target = $region9
  $region8: #{gcn_emb_disc_forward.1} parent=0 // pred_region
    _
  $region9: #{gcn_emb_disc_forward.1} parent=0 // pred_fallthru
    _
  // Predicated region
  $region10: #{gcn_emb_disc_forward.1} parent=0 // pred_check
    _
  $region11: #{gcn_emb_disc_forward.1} parent=0 // pred_check_branch
    %32 = sbr.rel (0) target = $region13
  $region12: #{gcn_emb_disc_forward.1} parent=0 // pred_region
    _
  $region13: #{gcn_emb_disc_forward.1} parent=0 // pred_fallthru
    _
  // Predicated region
  $region14: #{gcn_emb_disc_forward.1} parent=0 // pred_check
    _
  $region15: #{gcn_emb_disc_forward.1} parent=0 // pred_check_branch
    %34 = sbr.rel (0) target = $region17
  $region16: #{gcn_emb_disc_forward.1} parent=0 // pred_region
    _
  $region17: #{gcn_emb_disc_forward.1} parent=0 // pred_fallthru
    _
  // Predicated region
  $region18: #{gcn_emb_disc_forward.1} parent=0 // pred_check
    _
  $region19: #{gcn_emb_disc_forward.1} parent=0 // pred_check_branch
    %36 = sbr.rel (0) target = $region21
  $region20: #{gcn_emb_disc_forward.1} parent=0 // pred_region
    _
  $region21: #{gcn_emb_disc_forward.1} parent=0 // pred_fallthru
    _
  // Predicated region
  $region22: #{gcn_emb_disc_forward.1} parent=0 // pred_check
    _
  $region23: #{gcn_emb_disc_forward.1} parent=0 // pred_check_branch
    %38 = sbr.rel (0) target = $region25
  $region24: #{gcn_emb_disc_forward.1} parent=0 // pred_region
    _
  $region25: #{gcn_emb_disc_forward.1} parent=0 // pred_fallthru
    _
  // Predicated region
  $region26: #{gcn_emb_disc_forward.1} parent=0 // pred_check
    _
  $region27: #{gcn_emb_disc_forward.1} parent=0 // pred_check_branch
    %40 = sbr.rel (0) target = $region29
  $region28: #{gcn_emb_disc_forward.1} parent=0 // pred_region
    _
  $region29: #{gcn_emb_disc_forward.1} parent=0 // pred_fallthru
    _
  // Predicated region
  $region30: #{gcn_emb_disc_forward.1} parent=0 // pred_check
    _
  $region31: #{gcn_emb_disc_forward.1} parent=0 // pred_check_branch
    %42 = sbr.rel (0) target = $region33
  $region32: #{gcn_emb_disc_forward.1} parent=0 // pred_region
    _
  $region33: #{gcn_emb_disc_forward.1} parent=0 // pred_fallthru
    _
  // Predicated region
  $region34: #{gcn_emb_disc_forward.1} parent=0 // pred_check
    _
  $region35: #{gcn_emb_disc_forward.1} parent=0 // pred_check_branch
    %44 = sbr.rel (0) target = $region37
  $region36: #{gcn_emb_disc_forward.1} parent=0 // pred_region
    _
  $region37: #{gcn_emb_disc_forward.1} parent=0 // pred_fallthru
    _
  // Predicated region
  $region38: #{gcn_emb_disc_forward.1} parent=0 // pred_check
    _
  $region39: #{gcn_emb_disc_forward.1} parent=0 // pred_check_branch
    %46 = sbr.rel (0) target = $region41
  $region40: #{gcn_emb_disc_forward.1} parent=0 // pred_region
    _
  $region41: #{gcn_emb_disc_forward.1} parent=0 // pred_fallthru
    _
  // Predicated region
  $region42: #{gcn_emb_disc_forward.1} parent=0 // pred_check
    _
  $region43: #{gcn_emb_disc_forward.1} parent=0 // pred_check_branch
    %48 = sbr.rel (0) target = $region45
  $region44: #{gcn_emb_disc_forward.1} parent=0 // pred_region
    _
  $region45: #{gcn_emb_disc_forward.1} parent=0 // pred_fallthru
    _
  // Predicated region
  $region46: #{gcn_emb_disc_forward.1} parent=0 // pred_check
    _
  $region47: #{gcn_emb_disc_forward.1} parent=0 // pred_check_branch
    %50 = sbr.rel (0) target = $region49
  $region48: #{gcn_emb_disc_forward.1} parent=0 // pred_region
    _
  $region49: #{gcn_emb_disc_forward.1} parent=0 // pred_fallthru
    _
  // Predicated region
  $region50: #{gcn_emb_disc_forward.1} parent=0 // pred_check
    _
  $region51: #{gcn_emb_disc_forward.1} parent=0 // pred_check_branch
    %52 = sbr.rel (0) target = $region53
  $region52: #{gcn_emb_disc_forward.1} parent=0 // pred_region
    _
  $region53: #{gcn_emb_disc_forward.1} parent=0 // pred_fallthru
    _
  // Predicated region
  $region54: #{gcn_emb_disc_forward.1} parent=0 // pred_check
    _
  $region55: #{gcn_emb_disc_forward.1} parent=0 // pred_check_branch
    %54 = sbr.rel (0) target = $region57
  $region56: #{gcn_emb_disc_forward.1} parent=0 // pred_region
    _
  $region57: #{gcn_emb_disc_forward.1} parent=0 // pred_fallthru
    _
  // Predicated region
  $region58: #{gcn_emb_disc_forward.1} parent=0 // pred_check
    _
  $region59: #{gcn_emb_disc_forward.1} parent=0 // pred_check_branch
    %56 = sbr.rel (0) target = $region61
  $region60: #{gcn_emb_disc_forward.1} parent=0 // pred_region
    _
  $region61: #{gcn_emb_disc_forward.1} parent=0 // pred_fallthru
    _
  // Predicated region
  $region62: #{gcn_emb_disc_forward.1} parent=0 // pred_check
    _
  $region63: #{gcn_emb_disc_forward.1} parent=0 // pred_check_branch
    %58 = sbr.rel (0) target = $region65
  $region64: #{gcn_emb_disc_forward.1} parent=0 // pred_region
    _
  $region65: #{gcn_emb_disc_forward.1} parent=0 // pred_fallthru
    _
  // Predicated region
  $region66: #{gcn_emb_disc_forward.1} parent=0 // pred_check
    _
  $region67: #{gcn_emb_disc_forward.1} parent=0 // pred_check_branch
    %60 = sbr.rel (0) target = $region69
  $region68: #{gcn_emb_disc_forward.1} parent=0 // pred_region
    _
  $region69: #{gcn_emb_disc_forward.1} parent=0 // pred_fallthru
    _
  // Predicated region
  $region70: #{gcn_emb_disc_forward.1} parent=0 // pred_check
    _
  $region71: #{gcn_emb_disc_forward.1} parent=0 // pred_check_branch
    %62 = sbr.rel (0) target = $region73
  $region72: #{gcn_emb_disc_forward.1} parent=0 // pred_region
    _
  $region73: #{gcn_emb_disc_forward.1} parent=0 // pred_fallthru
    _
  // Predicated region
  $region74: #{gcn_emb_disc_forward.1} parent=0 // pred_check
    _
  $region75: #{gcn_emb_disc_forward.1} parent=0 // pred_check_branch
    %64 = sbr.rel (0) target = $region77
  $region76: #{gcn_emb_disc_forward.1} parent=0 // pred_region
    _
  $region77: #{gcn_emb_disc_forward.1} parent=0 // pred_fallthru
    _
  // Predicated region
  $region78: #{gcn_emb_disc_forward.1} parent=0 // pred_check
    _
  $region79: #{gcn_emb_disc_forward.1} parent=0 // pred_check_branch
    %66 = sbr.rel (0) target = $region81
  $region80: #{gcn_emb_disc_forward.1} parent=0 // pred_region
    _
  $region81: #{gcn_emb_disc_forward.1} parent=0 // pred_fallthru
    _
  %v68 = vld [vmem:[%s0] sm:$0xff]
  %v69 = vld [vmem:[%s0 + $0x8] sm:$0xff]
  %v70 = vld [vmem:[%s0 + $0x10] sm:$0xff]
  %v71 = vld [vmem:[%s0 + $0x18] sm:$0xff]
  %v72 = vld [vmem:[%s1] sm:$0xff]
  %v73 = vld [vmem:[%s2] sm:$0xf]
  %v74 = vld [vmem:[%s2 + $0x4] sm:$0xf]
  %v75 = vld [vmem:[%s2 + $0x8] sm:$0xf]
  %v76 = vld [vmem:[%s2 + $0xc] sm:$0xf]
  %v77 = vpack.c.bf16 %v69, %v68
  %v78 = vpack.c.bf16 %v71, %v70
  %v83 = vunpack.c.l.b16 %v73
  %v84 = vunpack.c.l.b16 %v74
  %v85 = vunpack.c.l.b16 %v75
  %v86 = vunpack.c.l.b16 %v76
  %v87 = vpack.c.b16 %v84, %v83
  %v88 = vpack.c.b16 %v86, %v85
  %vm89 = vcmask 261120
  %v91 = vsel %vm89, %v87, 0
  %v94 = vsel %vm89, %v88, 0
  %96 = vmatpush.bf16.msra.mxu0 0
  %97 = vmatpush.bf16.msra.mxu0 0
  %98 = vmatpush.bf16.msra.mxu0 0
  %99 = vmatpush.bf16.msra.mxu0 0
  %100 = vmatpush.bf16.msra.mxu0 0
  %101 = vmatpush.bf16.msra.mxu0 0
  %102 = vmatpush.bf16.msra.mxu0 %v78
  %103 = vmatpush.bf16.msra.mxu0 %v77
  %104 = vmatmul.bf16.gmra.mxu0 %v91
  %v105 = vpop.f32.mrf.mxu0
  %v106 = vadd.f32 0.0, %v105
  %v107 = vpop.f32.mrf.mxu0
  %v108 = vadd.f32 0.0, %v107
  %109 = vmatmul.bf16.gmra.mxu0 %v94
  %v110 = vpop.f32.mrf.mxu0
  %v111 = vadd.f32 0.0, %v110
  %v112 = vpop.f32.mrf.mxu0
  %v113 = vadd.f32 0.0, %v112
  %114 = vdwg.mxu0
  %v115 = vpack.c.bf16 %v108, %v106
  %v116 = vpack.c.bf16 %v113, %v111
  %v117 = vld [vmem:[%s3] sm:$0xf]
  %v118 = vld [vmem:[%s3 + $0x4] sm:$0xf]
  %v119 = vld [vmem:[%s3 + $0x8] sm:$0x3]
  %v120 = vld [vmem:[%s4] sm:$0x1]
  %v122 = vperm.slane %v120, 0
  %v127 = vunpack.c.l.b16 %v117
  %v128 = vunpack.c.l.b16 %v118
  %v129 = vunpack.c.l.b16 %v119
  %v130 = vpack.c.b16 %v128, %v127
  %v131 = vpack.c.b16 %v129, %v129
  %vm133 = vcmask 154624
  %v135 = vsel %vm133, %v115, 0
  %v138 = vsel %vm133, %v116, 0
  %vm140 = vcmask 1040384
  %vm141 = vcmask 1041408
  %v142 = vsel %vm140, 4294967295, 65535
  %v143 = vsel %vm141, %v142, 0
  %v145 = vand.u32 %v131, %v143
  %147 = vmatpush.bf16.msra.mxu0 0
  %148 = vmatpush.bf16.msra.mxu0 0
  %149 = vmatpush.bf16.msra.mxu0 0
  %150 = vmatpush.bf16.msra.mxu0 0
  %151 = vmatpush.bf16.msra.mxu0 0
  %152 = vmatpush.bf16.msra.mxu0 0
  %153 = vmatpush.bf16.msra.mxu0 %v145
  %154 = vmatpush.bf16.msra.mxu0 %v130
  %155 = vmatmul.bf16.gmra.mxu0 %v135
  %v156 = vpop.f32.mrf.mxu0
  %v157 = vadd.f32 %v122, %v156
  %v158 = vpop.f32.mrf.mxu0
  %v159 = vadd.f32 %v122, %v158
  %160 = vmatmul.bf16.gmra.mxu0 %v138
  %v161 = vpop.f32.mrf.mxu0
  %v162 = vadd.f32 %v122, %v161
  %v163 = vpop.f32.mrf.mxu0
  %v164 = vadd.f32 %v122, %v163
  %165 = vdwg.mxu0
  %v166 = vmax.f32 %v157, 0.0
  %v167 = vmax.f32 %v159, 0.0
  %v168 = vmax.f32 %v162, 0.0
  %v169 = vmax.f32 %v164, 0.0
  %v170 = vpack.c.bf16 %v167, %v166
  %v171 = vpack.c.bf16 %v169, %v168
  %172 = vmatpush.bf16.msra.mxu0 0
  %173 = vmatpush.bf16.msra.mxu0 0
  %174 = vmatpush.bf16.msra.mxu0 0
  %175 = vmatpush.bf16.msra.mxu0 0
  %176 = vmatpush.bf16.msra.mxu0 0
  %177 = vmatpush.bf16.msra.mxu0 0
  %178 = vmatpush.bf16.msra.mxu0 %v171
  %179 = vmatpush.bf16.msra.mxu0 %v170
  %180 = vmatmul.bf16.gmra.mxu0 %v91
  %v181 = vpop.f32.mrf.mxu0
  %v182 = vadd.f32 0.0, %v181
  %v183 = vpop.f32.mrf.mxu0
  %v184 = vadd.f32 0.0, %v183
  %185 = vmatmul.bf16.gmra.mxu0 %v94
  %v186 = vpop.f32.mrf.mxu0
  %v187 = vadd.f32 0.0, %v186
  %v188 = vpop.f32.mrf.mxu0
  %v189 = vadd.f32 0.0, %v188
  %190 = vdwg.mxu0
  %v191 = vpack.c.bf16 %v184, %v182
  %v192 = vpack.c.bf16 %v189, %v187
  %v193 = vld [vmem:[%s5] sm:$0xf]
  %v194 = vld [vmem:[%s5 + $0x4] sm:$0xf]
  %v195 = vld [vmem:[%s5 + $0x8] sm:$0xf]
  %v196 = vld [vmem:[%s5 + $0xc] sm:$0xf]
  %v197 = vld [vmem:[%s6] sm:$0x1]
  %v199 = vperm.slane %v197, 0
  %v205 = vunpack.c.l.b16 %v193
  %v206 = vunpack.c.l.b16 %v194
  %v207 = vunpack.c.l.b16 %v195
  %v208 = vunpack.c.l.b16 %v196
  %v209 = vpack.c.b16 %v206, %v205
  %v210 = vpack.c.b16 %v208, %v207
  %v214 = vsel %vm89, %v191, 0
  %v217 = vsel %vm89, %v192, 0
  %219 = vmatpush.bf16.msra.mxu0 0
  %220 = vmatpush.bf16.msra.mxu0 0
  %221 = vmatpush.bf16.msra.mxu0 0
  %222 = vmatpush.bf16.msra.mxu0 0
  %223 = vmatpush.bf16.msra.mxu0 0
  %224 = vmatpush.bf16.msra.mxu0 0
  %225 = vmatpush.bf16.msra.mxu0 %v210
  %226 = vmatpush.bf16.msra.mxu0 %v209
  %227 = vmatmul.bf16.gmra.mxu0 %v214
  %v228 = vpop.f32.mrf.mxu0
  %v229 = vadd.f32 %v199, %v228
  %v230 = vpop.f32.mrf.mxu0
  %v231 = vadd.f32 %v199, %v230
  %232 = vmatmul.bf16.gmra.mxu0 %v217
  %v233 = vpop.f32.mrf.mxu0
  %v234 = vadd.f32 %v199, %v233
  %v235 = vpop.f32.mrf.mxu0
  %v236 = vadd.f32 %v199, %v235
  %237 = vdwg.mxu0
  %vm238 = vcmp.gt.f32.partialorder %v229, 0.0
  %vm239 = vcmp.gt.f32.partialorder %v231, 0.0
  %vm240 = vcmp.gt.f32.partialorder %v234, 0.0
  %vm241 = vcmp.gt.f32.partialorder %v236, 0.0
  %v242 = vmul.f32 %v229, 0.01
  %v243 = vmul.f32 %v231, 0.01
  %v244 = vmul.f32 %v234, 0.01
  %v245 = vmul.f32 %v236, 0.01
  %v246 = vsel %vm238, %v229, %v242
  %v247 = vsel %vm239, %v231, %v243
  %v248 = vsel %vm240, %v234, %v244
  %v249 = vsel %vm241, %v236, %v245
  %v250 = vpack.c.bf16 %v247, %v246
  %v251 = vpack.c.bf16 %v249, %v248
  %252 = vmatpush.bf16.msra.mxu0 0
  %253 = vmatpush.bf16.msra.mxu0 0
  %254 = vmatpush.bf16.msra.mxu0 0
  %255 = vmatpush.bf16.msra.mxu0 0
  %256 = vmatpush.bf16.msra.mxu0 0
  %257 = vmatpush.bf16.msra.mxu0 0
  %258 = vmatpush.bf16.msra.mxu0 %v251
  %259 = vmatpush.bf16.msra.mxu0 %v250
  %260 = vmatmul.bf16.gmra.mxu0 %v91
  %v261 = vpop.f32.mrf.mxu0
  %v262 = vadd.f32 0.0, %v261
  %v263 = vpop.f32.mrf.mxu0
  %v264 = vadd.f32 0.0, %v263
  %265 = vmatmul.bf16.gmra.mxu0 %v94
  %v266 = vpop.f32.mrf.mxu0
  %v267 = vadd.f32 0.0, %v266
  %v268 = vpop.f32.mrf.mxu0
  %v269 = vadd.f32 0.0, %v268
  %270 = vdwg.mxu0
  %v271 = vpack.c.bf16 %v264, %v262
  %v272 = vpack.c.bf16 %v269, %v267
  %v273 = vld [vmem:[%s7] sm:$0xf]
  %v274 = vld [vmem:[%s7 + $0x4] sm:$0xf]
  %v275 = vld [vmem:[%s7 + $0x8] sm:$0xf]
  %v276 = vld [vmem:[%s7 + $0xc] sm:$0xf]
  %v277 = vld [vmem:[%s7 + $0x10] sm:$0xf]
  %v278 = vld [vmem:[%s7 + $0x14] sm:$0xf]
  %v279 = vld [vmem:[%s7 + $0x18] sm:$0xf]
  %v280 = vld [vmem:[%s7 + $0x1c] sm:$0xf]
  %v281 = vld [vmem:[%s8] sm:$0x1]
  %v283 = vperm.slane %v281, 0
  %v293 = vunpack.c.l.b16 %v273
  %v294 = vunpack.c.l.b16 %v274
  %v295 = vunpack.c.l.b16 %v275
  %v296 = vunpack.c.l.b16 %v276
  %v297 = vunpack.c.l.b16 %v277
  %v298 = vunpack.c.l.b16 %v278
  %v299 = vunpack.c.l.b16 %v279
  %v300 = vunpack.c.l.b16 %v280
  %v301 = vpack.c.b16 %v294, %v293
  %v302 = vpack.c.b16 %v296, %v295
  %v303 = vpack.c.b16 %v298, %v297
  %v304 = vpack.c.b16 %v300, %v299
  %vm309 = vcmask 523264
  %v311 = vsel %vm309, %v271, 0
  %v314 = vsel %vm309, %v272, 0
  %316 = vmatpush.bf16.msra.mxu0 0
  %317 = vmatpush.bf16.msra.mxu0 0
  %318 = vmatpush.bf16.msra.mxu0 0
  %319 = vmatpush.bf16.msra.mxu0 0
  %320 = vmatpush.bf16.msra.mxu0 %v304
  %321 = vmatpush.bf16.msra.mxu0 %v303
  %322 = vmatpush.bf16.msra.mxu0 %v302
  %323 = vmatpush.bf16.msra.mxu0 %v301
  %324 = vmatmul.bf16.gmra.mxu0 %v311
  %v325 = vpop.f32.mrf.mxu0
  %v326 = vadd.f32 %v283, %v325
  %v327 = vpop.f32.mrf.mxu0
  %v328 = vadd.f32 %v283, %v327
  %329 = vmatmul.bf16.gmra.mxu0 %v314
  %v330 = vpop.f32.mrf.mxu0
  %v331 = vadd.f32 %v283, %v330
  %v332 = vpop.f32.mrf.mxu0
  %v333 = vadd.f32 %v283, %v332
  %334 = vdwg.mxu0
  %vm335 = vcmp.gt.f32.partialorder %v326, 0.0
  %vm336 = vcmp.gt.f32.partialorder %v328, 0.0
  %vm337 = vcmp.gt.f32.partialorder %v331, 0.0
  %vm338 = vcmp.gt.f32.partialorder %v333, 0.0
  %v339 = vmul.f32 %v326, 0.01
  %v340 = vmul.f32 %v328, 0.01
  %v341 = vmul.f32 %v331, 0.01
  %v342 = vmul.f32 %v333, 0.01
  %v343 = vsel %vm335, %v326, %v339
  %v344 = vsel %vm336, %v328, %v340
  %v345 = vsel %vm337, %v331, %v341
  %v346 = vsel %vm338, %v333, %v342
  %v347 = vpack.c.bf16 %v344, %v343
  %v348 = vpack.c.bf16 %v346, %v345
  %v349 = vld [vmem:[%s9] sm:$0xf]
  %v350 = vld [vmem:[%s9 + $0x4] sm:$0xf]
  %v351 = vld [vmem:[%s9 + $0x8] sm:$0xf]
  %v352 = vld [vmem:[%s9 + $0xc] sm:$0xf]
  %v353 = vld [vmem:[%s9 + $0x10] sm:$0xf]
  %v354 = vld [vmem:[%s9 + $0x14] sm:$0xf]
  %v355 = vld [vmem:[%s9 + $0x18] sm:$0xf]
  %v356 = vld [vmem:[%s9 + $0x1c] sm:$0xf]
  %v365 = vunpack.c.l.b16 %v349
  %v366 = vunpack.c.l.b16 %v350
  %v367 = vunpack.c.l.b16 %v351
  %v368 = vunpack.c.l.b16 %v352
  %v369 = vunpack.c.l.b16 %v353
  %v370 = vunpack.c.l.b16 %v354
  %v371 = vunpack.c.l.b16 %v355
  %v372 = vunpack.c.l.b16 %v356
  %v373 = vpack.c.b16 %v366, %v365
  %v374 = vpack.c.b16 %v368, %v367
  %v375 = vpack.c.b16 %v370, %v369
  %v376 = vpack.c.b16 %v372, %v371
  %v382 = vsel %vm309, %v347, 0
  %v385 = vsel %vm309, %v348, 0
  %387 = vmatpush.bf16.msra.mxu0 0
  %388 = vmatpush.bf16.msra.mxu0 0
  %389 = vmatpush.bf16.msra.mxu0 0
  %390 = vmatpush.bf16.msra.mxu0 0
  %391 = vmatpush.bf16.msra.mxu0 %v376
  %392 = vmatpush.bf16.msra.mxu0 %v375
  %393 = vmatpush.bf16.msra.mxu0 %v374
  %394 = vmatpush.bf16.msra.mxu0 %v373
  %395 = vmatmul.bf16.gmra.mxu0 %v382
  %v396 = vpop.f32.mrf.mxu0
  %v397 = vadd.f32 0.0, %v396
  %v398 = vpop.f32.mrf.mxu0
  %v399 = vadd.f32 0.0, %v398
  %400 = vmatmul.bf16.gmra.mxu0 %v385
  %v401 = vpop.f32.mrf.mxu0
  %v402 = vadd.f32 0.0, %v401
  %v403 = vpop.f32.mrf.mxu0
  %v404 = vadd.f32 0.0, %v403
  %405 = vdwg.mxu0
  %v410 = vrot.slane %v397, 4
  %v411 = vrot.slane %v399, 4
  %v412 = vrot.slane %v402, 4
  %v413 = vrot.slane %v404, 4
  %418 = vset.pattern.permute.xlu0 65
  %419 = vperm.xlu0 %418, %v397
  %v420 = vpop.permute.xlu0 %419
  %v423 = vunpack.c.l.s4 839922192
  %v424 = vunpack.c.0.s8 %v423
  %v425 = vperm.slane %v420, %v424
  %426 = vset.pattern.permute.xlu0 65
  %427 = vperm.xlu0 %426, %v410
  %v428 = vpop.permute.xlu0 %427
  %v431 = vunpack.c.l.s4 839922192
  %v432 = vunpack.c.0.s8 %v431
  %v433 = vperm.slane %v428, %v432
  %434 = vset.pattern.permute.xlu0 65
  %435 = vperm.xlu0 %434, %v399
  %v436 = vpop.permute.xlu0 %435
  %v439 = vunpack.c.l.s4 839922192
  %v440 = vunpack.c.0.s8 %v439
  %v441 = vperm.slane %v436, %v440
  %442 = vset.pattern.permute.xlu0 65
  %443 = vperm.xlu0 %442, %v411
  %v444 = vpop.permute.xlu0 %443
  %v447 = vunpack.c.l.s4 839922192
  %v448 = vunpack.c.0.s8 %v447
  %v449 = vperm.slane %v444, %v448
  %450 = vset.pattern.permute.xlu0 65
  %451 = vperm.xlu0 %450, %v402
  %v452 = vpop.permute.xlu0 %451
  %v455 = vunpack.c.l.s4 839922192
  %v456 = vunpack.c.0.s8 %v455
  %v457 = vperm.slane %v452, %v456
  %458 = vset.pattern.permute.xlu0 65
  %459 = vperm.xlu0 %458, %v412
  %v460 = vpop.permute.xlu0 %459
  %v463 = vunpack.c.l.s4 839922192
  %v464 = vunpack.c.0.s8 %v463
  %v465 = vperm.slane %v460, %v464
  %466 = vset.pattern.permute.xlu0 65
  %467 = vperm.xlu0 %466, %v404
  %v468 = vpop.permute.xlu0 %467
  %v471 = vunpack.c.l.s4 839922192
  %v472 = vunpack.c.0.s8 %v471
  %v473 = vperm.slane %v468, %v472
  %474 = vset.pattern.permute.xlu0 65
  %475 = vperm.xlu0 %474, %v413
  %v476 = vpop.permute.xlu0 %475
  %v479 = vunpack.c.l.s4 839922192
  %v480 = vunpack.c.0.s8 %v479
  %v481 = vperm.slane %v476, %v480
  %482 = vst [vmem:[#allocation1] ss:$2 sm:$0xff] %v397
  %v483 = vld.sshfl [vmem:[#allocation1] sm:$0xff pattern:$0x75316420]
  %s484 = scalar_lea.vmem [#allocation1], 16
  %485 = vst [vmem:[%s484] ss:$2 sm:$0xff] %v397
  %v486 = vld.sshfl [vmem:[#allocation1 + $0x10] sm:$0xff pattern:$0x75316420]
  %s487 = scalar_lea.vmem [#allocation1], 32
  %488 = vst [vmem:[%s487] ss:$2 sm:$0xff] %v397
  %v489 = vld.sshfl [vmem:[#allocation1 + $0x20] sm:$0xff pattern:$0x75316420]
  %s490 = scalar_lea.vmem [#allocation1], 48
  %491 = vst [vmem:[%s490] ss:$2 sm:$0xff] %v397
  %v492 = vld.sshfl [vmem:[#allocation1 + $0x30] sm:$0xff pattern:$0x75316420]
  %493 = vst [vmem:[#allocation1] ss:$2 sm:$0xff] %v410
  %v494 = vld.sshfl [vmem:[#allocation1] sm:$0xff pattern:$0x75316420]
  %495 = vst [vmem:[%s484] ss:$2 sm:$0xff] %v410
  %v496 = vld.sshfl [vmem:[#allocation1 + $0x10] sm:$0xff pattern:$0x75316420]
  %497 = vst [vmem:[%s487] ss:$2 sm:$0xff] %v410
  %v498 = vld.sshfl [vmem:[#allocation1 + $0x20] sm:$0xff pattern:$0x75316420]
  %499 = vst [vmem:[%s490] ss:$2 sm:$0xff] %v410
  %v500 = vld.sshfl [vmem:[#allocation1 + $0x30] sm:$0xff pattern:$0x75316420]
  %501 = vst [vmem:[#allocation1] ss:$2 sm:$0xff] %v399
  %v502 = vld.sshfl [vmem:[#allocation1] sm:$0xff pattern:$0x75316420]
  %503 = vst [vmem:[%s484] ss:$2 sm:$0xff] %v399
  %v504 = vld.sshfl [vmem:[#allocation1 + $0x10] sm:$0xff pattern:$0x75316420]
  %505 = vst [vmem:[%s487] ss:$2 sm:$0xff] %v399
  %v506 = vld.sshfl [vmem:[#allocation1 + $0x20] sm:$0xff pattern:$0x75316420]
  %507 = vst [vmem:[%s490] ss:$2 sm:$0xff] %v399
  %v508 = vld.sshfl [vmem:[#allocation1 + $0x30] sm:$0xff pattern:$0x75316420]
  %509 = vst [vmem:[#allocation1] ss:$2 sm:$0xff] %v411
  %v510 = vld.sshfl [vmem:[#allocation1] sm:$0xff pattern:$0x75316420]
  %511 = vst [vmem:[%s484] ss:$2 sm:$0xff] %v411
  %v512 = vld.sshfl [vmem:[#allocation1 + $0x10] sm:$0xff pattern:$0x75316420]
  %513 = vst [vmem:[%s487] ss:$2 sm:$0xff] %v411
  %v514 = vld.sshfl [vmem:[#allocation1 + $0x20] sm:$0xff pattern:$0x75316420]
  %515 = vst [vmem:[%s490] ss:$2 sm:$0xff] %v411
  %v516 = vld.sshfl [vmem:[#allocation1 + $0x30] sm:$0xff pattern:$0x75316420]
  %517 = vst [vmem:[#allocation1] ss:$2 sm:$0xff] %v402
  %v518 = vld.sshfl [vmem:[#allocation1] sm:$0xff pattern:$0x75316420]
  %519 = vst [vmem:[%s484] ss:$2 sm:$0xff] %v402
  %v520 = vld.sshfl [vmem:[#allocation1 + $0x10] sm:$0xff pattern:$0x75316420]
  %521 = vst [vmem:[%s487] ss:$2 sm:$0xff] %v402
  %v522 = vld.sshfl [vmem:[#allocation1 + $0x20] sm:$0xff pattern:$0x75316420]
  %523 = vst [vmem:[%s490] ss:$2 sm:$0xff] %v402
  %v524 = vld.sshfl [vmem:[#allocation1 + $0x30] sm:$0xff pattern:$0x75316420]
  %525 = vst [vmem:[#allocation1] ss:$2 sm:$0xff] %v412
  %v526 = vld.sshfl [vmem:[#allocation1] sm:$0xff pattern:$0x75316420]
  %527 = vst [vmem:[%s484] ss:$2 sm:$0xff] %v412
  %v528 = vld.sshfl [vmem:[#allocation1 + $0x10] sm:$0xff pattern:$0x75316420]
  %529 = vst [vmem:[%s487] ss:$2 sm:$0xff] %v412
  %v530 = vld.sshfl [vmem:[#allocation1 + $0x20] sm:$0xff pattern:$0x75316420]
  %531 = vst [vmem:[%s490] ss:$2 sm:$0xff] %v412
  %v532 = vld.sshfl [vmem:[#allocation1 + $0x30] sm:$0xff pattern:$0x75316420]
  %533 = vst [vmem:[#allocation1] ss:$2 sm:$0xff] %v404
  %v534 = vld.sshfl [vmem:[#allocation1] sm:$0xff pattern:$0x75316420]
  %535 = vst [vmem:[%s484] ss:$2 sm:$0xff] %v404
  %v536 = vld.sshfl [vmem:[#allocation1 + $0x10] sm:$0xff pattern:$0x75316420]
  %537 = vst [vmem:[%s487] ss:$2 sm:$0xff] %v404
  %v538 = vld.sshfl [vmem:[#allocation1 + $0x20] sm:$0xff pattern:$0x75316420]
  %539 = vst [vmem:[%s490] ss:$2 sm:$0xff] %v404
  %v540 = vld.sshfl [vmem:[#allocation1 + $0x30] sm:$0xff pattern:$0x75316420]
  %541 = vst [vmem:[#allocation1] ss:$2 sm:$0xff] %v413
  %v542 = vld.sshfl [vmem:[#allocation1] sm:$0xff pattern:$0x75316420]
  %543 = vst [vmem:[%s484] ss:$2 sm:$0xff] %v413
  %v544 = vld.sshfl [vmem:[#allocation1 + $0x10] sm:$0xff pattern:$0x75316420]
  %545 = vst [vmem:[%s487] ss:$2 sm:$0xff] %v413
  %v546 = vld.sshfl [vmem:[#allocation1 + $0x20] sm:$0xff pattern:$0x75316420]
  %547 = vst [vmem:[%s490] ss:$2 sm:$0xff] %v413
  %v548 = vld.sshfl [vmem:[#allocation1 + $0x30] sm:$0xff pattern:$0x75316420]
  %549 = vset.pattern.permute.xlu0 64
  %550 = vperm.xlu0 %549, %v483
  %v551 = vpop.permute.xlu0 %550
  %552 = vset.pattern.permute.xlu0 64
  %553 = vperm.xlu0 %552, %v486
  %v554 = vpop.permute.xlu0 %553
  %555 = vset.pattern.permute.xlu0 64
  %556 = vperm.xlu0 %555, %v489
  %v557 = vpop.permute.xlu0 %556
  %558 = vset.pattern.permute.xlu0 64
  %559 = vperm.xlu0 %558, %v492
  %v560 = vpop.permute.xlu0 %559
  %561 = vset.pattern.permute.xlu0 64
  %562 = vperm.xlu0 %561, %v494
  %v563 = vpop.permute.xlu0 %562
  %564 = vset.pattern.permute.xlu0 64
  %565 = vperm.xlu0 %564, %v496
  %v566 = vpop.permute.xlu0 %565
  %567 = vset.pattern.permute.xlu0 64
  %568 = vperm.xlu0 %567, %v498
  %v569 = vpop.permute.xlu0 %568
  %570 = vset.pattern.permute.xlu0 64
  %571 = vperm.xlu0 %570, %v500
  %v572 = vpop.permute.xlu0 %571
  %573 = vset.pattern.permute.xlu0 64
  %574 = vperm.xlu0 %573, %v502
  %v575 = vpop.permute.xlu0 %574
  %576 = vset.pattern.permute.xlu0 64
  %577 = vperm.xlu0 %576, %v504
  %v578 = vpop.permute.xlu0 %577
  %579 = vset.pattern.permute.xlu0 64
  %580 = vperm.xlu0 %579, %v506
  %v581 = vpop.permute.xlu0 %580
  %582 = vset.pattern.permute.xlu0 64
  %583 = vperm.xlu0 %582, %v508
  %v584 = vpop.permute.xlu0 %583
  %585 = vset.pattern.permute.xlu0 64
  %586 = vperm.xlu0 %585, %v510
  %v587 = vpop.permute.xlu0 %586
  %588 = vset.pattern.permute.xlu0 64
  %589 = vperm.xlu0 %588, %v512
  %v590 = vpop.permute.xlu0 %589
  %591 = vset.pattern.permute.xlu0 64
  %592 = vperm.xlu0 %591, %v514
  %v593 = vpop.permute.xlu0 %592
  %594 = vset.pattern.permute.xlu0 64
  %595 = vperm.xlu0 %594, %v516
  %v596 = vpop.permute.xlu0 %595
  %597 = vset.pattern.permute.xlu0 64
  %598 = vperm.xlu0 %597, %v518
  %v599 = vpop.permute.xlu0 %598
  %600 = vset.pattern.permute.xlu0 64
  %601 = vperm.xlu0 %600, %v520
  %v602 = vpop.permute.xlu0 %601
  %603 = vset.pattern.permute.xlu0 64
  %604 = vperm.xlu0 %603, %v522
  %v605 = vpop.permute.xlu0 %604
  %606 = vset.pattern.permute.xlu0 64
  %607 = vperm.xlu0 %606, %v524
  %v608 = vpop.permute.xlu0 %607
  %609 = vset.pattern.permute.xlu0 64
  %610 = vperm.xlu0 %609, %v526
  %v611 = vpop.permute.xlu0 %610
  %612 = vset.pattern.permute.xlu0 64
  %613 = vperm.xlu0 %612, %v528
  %v614 = vpop.permute.xlu0 %613
  %615 = vset.pattern.permute.xlu0 64
  %616 = vperm.xlu0 %615, %v530
  %v617 = vpop.permute.xlu0 %616
  %618 = vset.pattern.permute.xlu0 64
  %619 = vperm.xlu0 %618, %v532
  %v620 = vpop.permute.xlu0 %619
  %621 = vset.pattern.permute.xlu0 64
  %622 = vperm.xlu0 %621, %v534
  %v623 = vpop.permute.xlu0 %622
  %624 = vset.pattern.permute.xlu0 64
  %625 = vperm.xlu0 %624, %v536
  %v626 = vpop.permute.xlu0 %625
  %627 = vset.pattern.permute.xlu0 64
  %628 = vperm.xlu0 %627, %v538
  %v629 = vpop.permute.xlu0 %628
  %630 = vset.pattern.permute.xlu0 64
  %631 = vperm.xlu0 %630, %v540
  %v632 = vpop.permute.xlu0 %631
  %633 = vset.pattern.permute.xlu0 64
  %634 = vperm.xlu0 %633, %v542
  %v635 = vpop.permute.xlu0 %634
  %636 = vset.pattern.permute.xlu0 64
  %637 = vperm.xlu0 %636, %v544
  %v638 = vpop.permute.xlu0 %637
  %639 = vset.pattern.permute.xlu0 64
  %640 = vperm.xlu0 %639, %v546
  %v641 = vpop.permute.xlu0 %640
  %642 = vset.pattern.permute.xlu0 64
  %643 = vperm.xlu0 %642, %v548
  %v644 = vpop.permute.xlu0 %643
  %v645 = vlaneseq
  %v646 = vand.u32 %v645, 127
  %v647 = vperm.slane %v551, %v646
  %v648 = vperm.slane %v554, %v646
  %v649 = vperm.slane %v557, %v646
  %v650 = vperm.slane %v560, %v646
  %v651 = vperm.slane %v563, %v646
  %v652 = vperm.slane %v566, %v646
  %v653 = vperm.slane %v569, %v646
  %v654 = vperm.slane %v572, %v646
  %v655 = vperm.slane %v575, %v646
  %v656 = vperm.slane %v578, %v646
  %v657 = vperm.slane %v581, %v646
  %v658 = vperm.slane %v584, %v646
  %v659 = vperm.slane %v587, %v646
  %v660 = vperm.slane %v590, %v646
  %v661 = vperm.slane %v593, %v646
  %v662 = vperm.slane %v596, %v646
  %v663 = vperm.slane %v599, %v646
  %v664 = vperm.slane %v602, %v646
  %v665 = vperm.slane %v605, %v646
  %v666 = vperm.slane %v608, %v646
  %v667 = vperm.slane %v611, %v646
  %v668 = vperm.slane %v614, %v646
  %v669 = vperm.slane %v617, %v646
  %v670 = vperm.slane %v620, %v646
  %v671 = vperm.slane %v623, %v646
  %v672 = vperm.slane %v626, %v646
  %v673 = vperm.slane %v629, %v646
  %v674 = vperm.slane %v632, %v646
  %v675 = vperm.slane %v635, %v646
  %v676 = vperm.slane %v638, %v646
  %v677 = vperm.slane %v641, %v646
  %v678 = vperm.slane %v644, %v646
  %vm679 = vcmask 1041409
  %v680 = vsel %vm679, %v648, %v647
  %vm681 = vcmask 1042434
  %v682 = vsel %vm681, %v649, %v680
  %vm683 = vcmask 1043459
  %v684 = vsel %vm683, %v650, %v682
  %v685 = vsel %vm679, %v652, %v651
  %v686 = vsel %vm681, %v653, %v685
  %v687 = vsel %vm683, %v654, %v686
  %v688 = vsel %vm679, %v656, %v655
  %v689 = vsel %vm681, %v657, %v688
  %v690 = vsel %vm683, %v658, %v689
  %v691 = vsel %vm679, %v660, %v659
  %v692 = vsel %vm681, %v661, %v691
  %v693 = vsel %vm683, %v662, %v692
  %v694 = vsel %vm679, %v664, %v663
  %v695 = vsel %vm681, %v665, %v694
  %v696 = vsel %vm683, %v666, %v695
  %v697 = vsel %vm679, %v668, %v667
  %v698 = vsel %vm681, %v669, %v697
  %v699 = vsel %vm683, %v670, %v698
  %v700 = vsel %vm679, %v672, %v671
  %v701 = vsel %vm681, %v673, %v700
  %v702 = vsel %vm683, %v674, %v701
  %v703 = vsel %vm679, %v676, %v675
  %v704 = vsel %vm681, %v677, %v703
  %v705 = vsel %vm683, %v678, %v704
  %v714 = vadd.f32 %v425, %v684
  %v715 = vadd.f32 %v433, %v687
  %v716 = vadd.f32 %v441, %v690
  %v717 = vadd.f32 %v449, %v693
  %v718 = vadd.f32 %v457, %v696
  %v719 = vadd.f32 %v465, %v699
  %v720 = vadd.f32 %v473, %v702
  %v721 = vadd.f32 %v481, %v705
  %vm722 = vcmp.gt.f32.partialorder %v714, 0.0
  %vm723 = vcmp.gt.f32.partialorder %v715, 0.0
  %vm724 = vcmp.gt.f32.partialorder %v716, 0.0
  %vm725 = vcmp.gt.f32.partialorder %v717, 0.0
  %vm726 = vcmp.gt.f32.partialorder %v718, 0.0
  %vm727 = vcmp.gt.f32.partialorder %v719, 0.0
  %vm728 = vcmp.gt.f32.partialorder %v720, 0.0
  %vm729 = vcmp.gt.f32.partialorder %v721, 0.0
  %v730 = vmul.f32 %v714, 0.2
  %v731 = vmul.f32 %v715, 0.2
  %v732 = vmul.f32 %v716, 0.2
  %v733 = vmul.f32 %v717, 0.2
  %v734 = vmul.f32 %v718, 0.2
  %v735 = vmul.f32 %v719, 0.2
  %v736 = vmul.f32 %v720, 0.2
  %v737 = vmul.f32 %v721, 0.2
  %v738 = vsel %vm722, %v714, %v730
  %v739 = vsel %vm723, %v715, %v731
  %v740 = vsel %vm724, %v716, %v732
  %v741 = vsel %vm725, %v717, %v733
  %v742 = vsel %vm726, %v718, %v734
  %v743 = vsel %vm727, %v719, %v735
  %v744 = vsel %vm728, %v720, %v736
  %v745 = vsel %vm729, %v721, %v737
  %vm746 = vcmask 27648
  %v747 = vsel %vm746, %v738, -inf
  %748 = vmax.xlane.f32.xlu0 %v747
  %v749 = vpop.xlane.xlu0 %748
  %v750 = vsel %vm746, %v739, -inf
  %751 = vmax.xlane.f32.xlu0 %v750
  %v752 = vpop.xlane.xlu0 %751
  %v753 = vsel %vm746, %v740, -inf
  %754 = vmax.xlane.f32.xlu0 %v753
  %v755 = vpop.xlane.xlu0 %754
  %v756 = vsel %vm746, %v741, -inf
  %757 = vmax.xlane.f32.xlu0 %v756
  %v758 = vpop.xlane.xlu0 %757
  %v759 = vsel %vm746, %v742, -inf
  %760 = vmax.xlane.f32.xlu0 %v759
  %v761 = vpop.xlane.xlu0 %760
  %v762 = vsel %vm746, %v743, -inf
  %763 = vmax.xlane.f32.xlu0 %v762
  %v764 = vpop.xlane.xlu0 %763
  %v765 = vsel %vm746, %v744, -inf
  %766 = vmax.xlane.f32.xlu0 %v765
  %v767 = vpop.xlane.xlu0 %766
  %v768 = vsel %vm746, %v745, -inf
  %769 = vmax.xlane.f32.xlu0 %v768
  %v770 = vpop.xlane.xlu0 %769
  %v771 = vsub.f32 %v738, %v749
  %v772 = vsub.f32 %v739, %v752
  %v773 = vsub.f32 %v740, %v755
  %v774 = vsub.f32 %v741, %v758
  %v775 = vsub.f32 %v742, %v761
  %v776 = vsub.f32 %v743, %v764
  %v777 = vsub.f32 %v744, %v767
  %v778 = vsub.f32 %v745, %v770
  %v779 = vmul.f32 %v771, 1.442695
  %v780 = vpow.pop %v779
  %v781 = vmul.f32 %v772, 1.442695
  %v782 = vpow.pop %v781
  %v783 = vmul.f32 %v773, 1.442695
  %v784 = vpow.pop %v783
  %v785 = vmul.f32 %v774, 1.442695
  %v786 = vpow.pop %v785
  %v787 = vmul.f32 %v775, 1.442695
  %v788 = vpow.pop %v787
  %v789 = vmul.f32 %v776, 1.442695
  %v790 = vpow.pop %v789
  %v791 = vmul.f32 %v777, 1.442695
  %v792 = vpow.pop %v791
  %v793 = vmul.f32 %v778, 1.442695
  %v794 = vpow.pop %v793
  %v795 = vsel %vm746, %v780, 0.0
  %796 = vadd.xlane.f32.xlu0 %v795
  %v797 = vpop.xlane.xlu0 %796
  %v798 = vsel %vm746, %v782, 0.0
  %799 = vadd.xlane.f32.xlu0 %v798
  %v800 = vpop.xlane.xlu0 %799
  %v801 = vsel %vm746, %v784, 0.0
  %802 = vadd.xlane.f32.xlu0 %v801
  %v803 = vpop.xlane.xlu0 %802
  %v804 = vsel %vm746, %v786, 0.0
  %805 = vadd.xlane.f32.xlu0 %v804
  %v806 = vpop.xlane.xlu0 %805
  %v807 = vsel %vm746, %v788, 0.0
  %808 = vadd.xlane.f32.xlu0 %v807
  %v809 = vpop.xlane.xlu0 %808
  %v810 = vsel %vm746, %v790, 0.0
  %811 = vadd.xlane.f32.xlu0 %v810
  %v812 = vpop.xlane.xlu0 %811
  %v813 = vsel %vm746, %v792, 0.0
  %814 = vadd.xlane.f32.xlu0 %v813
  %v815 = vpop.xlane.xlu0 %814
  %v816 = vsel %vm746, %v794, 0.0
  %817 = vadd.xlane.f32.xlu0 %v816
  %v818 = vpop.xlane.xlu0 %817
  %v819 = vrcp.pop %v797
  %v820 = vrcp.pop %v800
  %v821 = vrcp.pop %v803
  %v822 = vrcp.pop %v806
  %v823 = vrcp.pop %v809
  %v824 = vrcp.pop %v812
  %v825 = vrcp.pop %v815
  %v826 = vrcp.pop %v818
  %v827 = vmul.f32 %v780, %v819
  %v828 = vmul.f32 %v782, %v820
  %v829 = vmul.f32 %v784, %v821
  %v830 = vmul.f32 %v786, %v822
  %v831 = vmul.f32 %v788, %v823
  %v832 = vmul.f32 %v790, %v824
  %v833 = vmul.f32 %v792, %v825
  %v834 = vmul.f32 %v794, %v826
  %v835 = vsel %vm746, %v827, 0.0
  %v836 = vrot.slane %v835, 4
  %v837 = vadd.f32 %v835, %v836
  %v838 = vrot.slane %v837, 2
  %v839 = vadd.f32 %v837, %v838
  %v840 = vrot.slane %v839, 1
  %v841 = vadd.f32 %v839, %v840
  %v842 = vsel %vm746, %v828, 0.0
  %v843 = vrot.slane %v842, 4
  %v844 = vadd.f32 %v842, %v843
  %v845 = vrot.slane %v844, 2
  %v846 = vadd.f32 %v844, %v845
  %v847 = vrot.slane %v846, 1
  %v848 = vadd.f32 %v846, %v847
  %v849 = vsel %vm746, %v829, 0.0
  %v850 = vrot.slane %v849, 4
  %v851 = vadd.f32 %v849, %v850
  %v852 = vrot.slane %v851, 2
  %v853 = vadd.f32 %v851, %v852
  %v854 = vrot.slane %v853, 1
  %v855 = vadd.f32 %v853, %v854
  %v856 = vsel %vm746, %v830, 0.0
  %v857 = vrot.slane %v856, 4
  %v858 = vadd.f32 %v856, %v857
  %v859 = vrot.slane %v858, 2
  %v860 = vadd.f32 %v858, %v859
  %v861 = vrot.slane %v860, 1
  %v862 = vadd.f32 %v860, %v861
  %v863 = vsel %vm746, %v831, 0.0
  %v864 = vrot.slane %v863, 4
  %v865 = vadd.f32 %v863, %v864
  %v866 = vrot.slane %v865, 2
  %v867 = vadd.f32 %v865, %v866
  %v868 = vrot.slane %v867, 1
  %v869 = vadd.f32 %v867, %v868
  %v870 = vsel %vm746, %v832, 0.0
  %v871 = vrot.slane %v870, 4
  %v872 = vadd.f32 %v870, %v871
  %v873 = vrot.slane %v872, 2
  %v874 = vadd.f32 %v872, %v873
  %v875 = vrot.slane %v874, 1
  %v876 = vadd.f32 %v874, %v875
  %v877 = vsel %vm746, %v833, 0.0
  %v878 = vrot.slane %v877, 4
  %v879 = vadd.f32 %v877, %v878
  %v880 = vrot.slane %v879, 2
  %v881 = vadd.f32 %v879, %v880
  %v882 = vrot.slane %v881, 1
  %v883 = vadd.f32 %v881, %v882
  %v884 = vsel %vm746, %v834, 0.0
  %v885 = vrot.slane %v884, 4
  %v886 = vadd.f32 %v884, %v885
  %v887 = vrot.slane %v886, 2
  %v888 = vadd.f32 %v886, %v887
  %v889 = vrot.slane %v888, 1
  %v890 = vadd.f32 %v888, %v889
  %v891 = vrcp.pop 4.0
  %v892 = vmul.f32 4.0, %v891
  %v893 = vsub.f32 1.0, %v892
  %v894 = vmul.f32 %v891, %v893
  %v895 = vadd.f32 %v891, %v894
  %vm896 = vweird.f32 %v891
  %v897 = vsel %vm896, %v891, %v895
  %v898 = vmul.f32 %v841, %v897
  %v899 = vmul.f32 %v848, %v897
  %v900 = vmul.f32 %v855, %v897
  %v901 = vmul.f32 %v862, %v897
  %v902 = vmul.f32 %v869, %v897
  %v903 = vmul.f32 %v876, %v897
  %v904 = vmul.f32 %v883, %v897
  %v905 = vmul.f32 %v890, %v897
  %907 = vset.pattern.permute.xlu0 0
  %908 = vperm.xlu0 %907, %v898
  %v909 = vpop.permute.xlu0 %908
  %912 = vset.pattern.permute.xlu0 0
  %913 = vperm.xlu0 %912, %v899
  %v914 = vpop.permute.xlu0 %913
  %917 = vset.pattern.permute.xlu0 0
  %918 = vperm.xlu0 %917, %v900
  %v919 = vpop.permute.xlu0 %918
  %922 = vset.pattern.permute.xlu0 0
  %923 = vperm.xlu0 %922, %v901
  %v924 = vpop.permute.xlu0 %923
  %927 = vset.pattern.permute.xlu0 0
  %928 = vperm.xlu0 %927, %v902
  %v929 = vpop.permute.xlu0 %928
  %932 = vset.pattern.permute.xlu0 0
  %933 = vperm.xlu0 %932, %v903
  %v934 = vpop.permute.xlu0 %933
  %937 = vset.pattern.permute.xlu0 0
  %938 = vperm.xlu0 %937, %v904
  %v939 = vpop.permute.xlu0 %938
  %942 = vset.pattern.permute.xlu0 0
  %943 = vperm.xlu0 %942, %v905
  %v944 = vpop.permute.xlu0 %943
  %v946 = vmul.f32 %v909, %v397
  %v947 = vmul.f32 %v914, %v410
  %v948 = vmul.f32 %v919, %v399
  %v949 = vmul.f32 %v924, %v411
  %v950 = vmul.f32 %v929, %v402
  %v951 = vmul.f32 %v934, %v412
  %v952 = vmul.f32 %v939, %v404
  %v953 = vmul.f32 %v944, %v413
  %954 = vset.pattern.permute.xlu0 1
  %955 = vperm.xlu0 %954, %v898
  %v956 = vpop.permute.xlu0 %955
  %958 = vset.pattern.permute.xlu0 1
  %959 = vperm.xlu0 %958, %v899
  %v960 = vpop.permute.xlu0 %959
  %962 = vset.pattern.permute.xlu0 1
  %963 = vperm.xlu0 %962, %v900
  %v964 = vpop.permute.xlu0 %963
  %966 = vset.pattern.permute.xlu0 1
  %967 = vperm.xlu0 %966, %v901
  %v968 = vpop.permute.xlu0 %967
  %970 = vset.pattern.permute.xlu0 1
  %971 = vperm.xlu0 %970, %v902
  %v972 = vpop.permute.xlu0 %971
  %974 = vset.pattern.permute.xlu0 1
  %975 = vperm.xlu0 %974, %v903
  %v976 = vpop.permute.xlu0 %975
  %978 = vset.pattern.permute.xlu0 1
  %979 = vperm.xlu0 %978, %v904
  %v980 = vpop.permute.xlu0 %979
  %982 = vset.pattern.permute.xlu0 1
  %983 = vperm.xlu0 %982, %v905
  %v984 = vpop.permute.xlu0 %983
  %v986 = vmul.f32 %v956, %v397
  %v987 = vmul.f32 %v960, %v410
  %v988 = vmul.f32 %v964, %v399
  %v989 = vmul.f32 %v968, %v411
  %v990 = vmul.f32 %v972, %v402
  %v991 = vmul.f32 %v976, %v412
  %v992 = vmul.f32 %v980, %v404
  %v993 = vmul.f32 %v984, %v413
  %v1002 = vrot.slane %v986, 5
  %v1003 = vrot.slane %v1002, 4
  %v1004 = vrot.slane %v987, 5
  %v1005 = vrot.slane %v1004, 4
  %v1006 = vrot.slane %v988, 5
  %v1007 = vrot.slane %v1006, 4
  %v1008 = vrot.slane %v989, 5
  %v1009 = vrot.slane %v1008, 4
  %v1010 = vrot.slane %v990, 5
  %v1011 = vrot.slane %v1010, 4
  %v1012 = vrot.slane %v991, 5
  %v1013 = vrot.slane %v1012, 4
  %v1014 = vrot.slane %v992, 5
  %v1015 = vrot.slane %v1014, 4
  %v1016 = vrot.slane %v993, 5
  %v1017 = vrot.slane %v1016, 4
  %v1026 = vadd.f32 %v946, %v1003
  %v1027 = vadd.f32 %v947, %v1005
  %v1028 = vadd.f32 %v948, %v1007
  %v1029 = vadd.f32 %v949, %v1009
  %v1030 = vadd.f32 %v950, %v1011
  %v1031 = vadd.f32 %v951, %v1013
  %v1032 = vadd.f32 %v952, %v1015
  %v1033 = vadd.f32 %v953, %v1017
  %1034 = vset.pattern.permute.xlu0 2
  %1035 = vperm.xlu0 %1034, %v898
  %v1036 = vpop.permute.xlu0 %1035
  %1038 = vset.pattern.permute.xlu0 2
  %1039 = vperm.xlu0 %1038, %v899
  %v1040 = vpop.permute.xlu0 %1039
  %1042 = vset.pattern.permute.xlu0 2
  %1043 = vperm.xlu0 %1042, %v900
  %v1044 = vpop.permute.xlu0 %1043
  %1046 = vset.pattern.permute.xlu0 2
  %1047 = vperm.xlu0 %1046, %v901
  %v1048 = vpop.permute.xlu0 %1047
  %1050 = vset.pattern.permute.xlu0 2
  %1051 = vperm.xlu0 %1050, %v902
  %v1052 = vpop.permute.xlu0 %1051
  %1054 = vset.pattern.permute.xlu0 2
  %1055 = vperm.xlu0 %1054, %v903
  %v1056 = vpop.permute.xlu0 %1055
  %1058 = vset.pattern.permute.xlu0 2
  %1059 = vperm.xlu0 %1058, %v904
  %v1060 = vpop.permute.xlu0 %1059
  %1062 = vset.pattern.permute.xlu0 2
  %1063 = vperm.xlu0 %1062, %v905
  %v1064 = vpop.permute.xlu0 %1063
  %v1066 = vmul.f32 %v1036, %v397
  %v1067 = vmul.f32 %v1040, %v410
  %v1068 = vmul.f32 %v1044, %v399
  %v1069 = vmul.f32 %v1048, %v411
  %v1070 = vmul.f32 %v1052, %v402
  %v1071 = vmul.f32 %v1056, %v412
  %v1072 = vmul.f32 %v1060, %v404
  %v1073 = vmul.f32 %v1064, %v413
  %v1082 = vrot.slane %v1066, 6
  %v1083 = vrot.slane %v1082, 4
  %v1084 = vrot.slane %v1067, 6
  %v1085 = vrot.slane %v1084, 4
  %v1086 = vrot.slane %v1068, 6
  %v1087 = vrot.slane %v1086, 4
  %v1088 = vrot.slane %v1069, 6
  %v1089 = vrot.slane %v1088, 4
  %v1090 = vrot.slane %v1070, 6
  %v1091 = vrot.slane %v1090, 4
  %v1092 = vrot.slane %v1071, 6
  %v1093 = vrot.slane %v1092, 4
  %v1094 = vrot.slane %v1072, 6
  %v1095 = vrot.slane %v1094, 4
  %v1096 = vrot.slane %v1073, 6
  %v1097 = vrot.slane %v1096, 4
  %v1106 = vadd.f32 %v1026, %v1083
  %v1107 = vadd.f32 %v1027, %v1085
  %v1108 = vadd.f32 %v1028, %v1087
  %v1109 = vadd.f32 %v1029, %v1089
  %v1110 = vadd.f32 %v1030, %v1091
  %v1111 = vadd.f32 %v1031, %v1093
  %v1112 = vadd.f32 %v1032, %v1095
  %v1113 = vadd.f32 %v1033, %v1097
  %1114 = vset.pattern.permute.xlu0 3
  %1115 = vperm.xlu0 %1114, %v898
  %v1116 = vpop.permute.xlu0 %1115
  %1118 = vset.pattern.permute.xlu0 3
  %1119 = vperm.xlu0 %1118, %v899
  %v1120 = vpop.permute.xlu0 %1119
  %1122 = vset.pattern.permute.xlu0 3
  %1123 = vperm.xlu0 %1122, %v900
  %v1124 = vpop.permute.xlu0 %1123
  %1126 = vset.pattern.permute.xlu0 3
  %1127 = vperm.xlu0 %1126, %v901
  %v1128 = vpop.permute.xlu0 %1127
  %1130 = vset.pattern.permute.xlu0 3
  %1131 = vperm.xlu0 %1130, %v902
  %v1132 = vpop.permute.xlu0 %1131
  %1134 = vset.pattern.permute.xlu0 3
  %1135 = vperm.xlu0 %1134, %v903
  %v1136 = vpop.permute.xlu0 %1135
  %1138 = vset.pattern.permute.xlu0 3
  %1139 = vperm.xlu0 %1138, %v904
  %v1140 = vpop.permute.xlu0 %1139
  %1142 = vset.pattern.permute.xlu0 3
  %1143 = vperm.xlu0 %1142, %v905
  %v1144 = vpop.permute.xlu0 %1143
  %v1146 = vmul.f32 %v1116, %v397
  %v1147 = vmul.f32 %v1120, %v410
  %v1148 = vmul.f32 %v1124, %v399
  %v1149 = vmul.f32 %v1128, %v411
  %v1150 = vmul.f32 %v1132, %v402
  %v1151 = vmul.f32 %v1136, %v412
  %v1152 = vmul.f32 %v1140, %v404
  %v1153 = vmul.f32 %v1144, %v413
  %v1162 = vrot.slane %v1146, 7
  %v1163 = vrot.slane %v1162, 4
  %v1164 = vrot.slane %v1147, 7
  %v1165 = vrot.slane %v1164, 4
  %v1166 = vrot.slane %v1148, 7
  %v1167 = vrot.slane %v1166, 4
  %v1168 = vrot.slane %v1149, 7
  %v1169 = vrot.slane %v1168, 4
  %v1170 = vrot.slane %v1150, 7
  %v1171 = vrot.slane %v1170, 4
  %v1172 = vrot.slane %v1151, 7
  %v1173 = vrot.slane %v1172, 4
  %v1174 = vrot.slane %v1152, 7
  %v1175 = vrot.slane %v1174, 4
  %v1176 = vrot.slane %v1153, 7
  %v1177 = vrot.slane %v1176, 4
  %v1186 = vadd.f32 %v1106, %v1163
  %v1187 = vadd.f32 %v1107, %v1165
  %v1188 = vadd.f32 %v1108, %v1167
  %v1189 = vadd.f32 %v1109, %v1169
  %v1190 = vadd.f32 %v1110, %v1171
  %v1191 = vadd.f32 %v1111, %v1173
  %v1192 = vadd.f32 %v1112, %v1175
  %v1193 = vadd.f32 %v1113, %v1177
  %v1194 = vld [vmem:[%s10] sm:$0x1]
  %v1196 = vperm.slane %v1194, 0
  %v1197 = vrot.slane %v1196, 4
  %v1198 = vrot.slane %v1196, 1
  %v1199 = vrot.slane %v1196, 2
  %v1200 = vrot.slane %v1196, 3
  %v1201 = vrot.slane %v1197, 1
  %v1202 = vrot.slane %v1197, 2
  %v1203 = vrot.slane %v1197, 3
  %v1212 = vadd.f32 %v1186, %v1196
  %v1213 = vadd.f32 %v1187, %v1198
  %v1214 = vadd.f32 %v1188, %v1199
  %v1215 = vadd.f32 %v1189, %v1200
  %v1216 = vadd.f32 %v1190, %v1197
  %v1217 = vadd.f32 %v1191, %v1201
  %v1218 = vadd.f32 %v1192, %v1202
  %v1219 = vadd.f32 %v1193, %v1203
  %v1220 = vpack.c.bf16 %v1212, %v1212
  %v1221 = vpack.c.bf16 %v1213, %v1213
  %v1222 = vpack.c.bf16 %v1214, %v1214
  %v1223 = vpack.c.bf16 %v1215, %v1215
  %v1224 = vpack.c.bf16 %v1216, %v1216
  %v1225 = vpack.c.bf16 %v1217, %v1217
  %v1226 = vpack.c.bf16 %v1218, %v1218
  %v1227 = vpack.c.bf16 %v1219, %v1219
  %v1228 = vld [vmem:[%s11] sm:$0xf]
  %v1229 = vld [vmem:[%s11 + $0x4] sm:$0xf]
  %v1230 = vld [vmem:[%s11 + $0x8] sm:$0xf]
  %v1231 = vld [vmem:[%s11 + $0xc] sm:$0xf]
  %v1232 = vld [vmem:[%s11 + $0x10] sm:$0xf]
  %v1233 = vld [vmem:[%s11 + $0x14] sm:$0xf]
  %v1234 = vld [vmem:[%s11 + $0x18] sm:$0xf]
  %v1235 = vld [vmem:[%s11 + $0x1c] sm:$0xf]
  %v1244 = vunpack.c.l.b16 %v1220
  %v1245 = vunpack.c.l.b16 %v1221
  %v1246 = vunpack.c.l.b16 %v1222
  %v1247 = vunpack.c.l.b16 %v1223
  %v1248 = vunpack.c.l.b16 %v1224
  %v1249 = vunpack.c.l.b16 %v1225
  %v1250 = vunpack.c.l.b16 %v1226
  %v1251 = vunpack.c.l.b16 %v1227
  %v1252 = vrot.slane %v1245, 7
  %v1253 = vsel %vm679, %v1252, %v1244
  %v1254 = vrot.slane %v1246, 6
  %v1255 = vsel %vm681, %v1254, %v1253
  %v1256 = vrot.slane %v1247, 5
  %v1257 = vsel %vm683, %v1256, %v1255
  %v1258 = vrot.slane %v1248, 4
  %vm1259 = vcmask 1044484
  %v1260 = vsel %vm1259, %v1258, %v1257
  %v1261 = vrot.slane %v1249, 3
  %vm1262 = vcmask 1045509
  %v1263 = vsel %vm1262, %v1261, %v1260
  %v1264 = vrot.slane %v1250, 2
  %vm1265 = vcmask 1046534
  %v1266 = vsel %vm1265, %v1264, %v1263
  %v1267 = vrot.slane %v1251, 1
  %vm1268 = vcmask 1047559
  %v1269 = vsel %vm1268, %v1267, %v1266
  %v1270 = vpack.c.b16 %v1269, %v1269
  %v1279 = vunpack.c.l.b16 %v1228
  %v1280 = vunpack.c.l.b16 %v1229
  %v1281 = vunpack.c.l.b16 %v1230
  %v1282 = vunpack.c.l.b16 %v1231
  %v1283 = vunpack.c.l.b16 %v1232
  %v1284 = vunpack.c.l.b16 %v1233
  %v1285 = vunpack.c.l.b16 %v1234
  %v1286 = vunpack.c.l.b16 %v1235
  %v1287 = vpack.c.b16 %v1280, %v1279
  %v1288 = vpack.c.b16 %v1282, %v1281
  %v1289 = vpack.c.b16 %v1284, %v1283
  %v1290 = vpack.c.b16 %v1286, %v1285
  %v1296 = vsel %vm309, %v1270, 0
  %1298 = vmatpush.bf16.msra.mxu0 0
  %1299 = vmatpush.bf16.msra.mxu0 0
  %1300 = vmatpush.bf16.msra.mxu0 0
  %1301 = vmatpush.bf16.msra.mxu0 0
  %1302 = vmatpush.bf16.msra.mxu0 %v1290
  %1303 = vmatpush.bf16.msra.mxu0 %v1289
  %1304 = vmatpush.bf16.msra.mxu0 %v1288
  %1305 = vmatpush.bf16.msra.mxu0 %v1287
  %1306 = vmatmul.bf16.gmra.mxu0 %v1296
  %v1307 = vpop.f32.mrf.mxu0
  %v1308 = vadd.f32 0.0, %v1307
  %v1309 = vpop.f32.mrf.mxu0
  %1310 = vdwg.mxu0
  %v1312 = vrot.slane %v1308, 4
  %1314 = vset.pattern.permute.xlu0 65
  %1315 = vperm.xlu0 %1314, %v1308
  %v1316 = vpop.permute.xlu0 %1315
  %v1319 = vunpack.c.l.s4 839922192
  %v1320 = vunpack.c.0.s8 %v1319
  %v1321 = vperm.slane %v1316, %v1320
  %1322 = vset.pattern.permute.xlu0 65
  %1323 = vperm.xlu0 %1322, %v1312
  %v1324 = vpop.permute.xlu0 %1323
  %v1327 = vunpack.c.l.s4 839922192
  %v1328 = vunpack.c.0.s8 %v1327
  %v1329 = vperm.slane %v1324, %v1328
  %1330 = vst [vmem:[#allocation1] ss:$2 sm:$0xff] %v1308
  %v1331 = vld.sshfl [vmem:[#allocation1] sm:$0xff pattern:$0x75316420]
  %s1332 = scalar_lea.vmem [#allocation1], 16
  %1333 = vst [vmem:[%s1332] ss:$2 sm:$0xff] %v1308
  %v1334 = vld.sshfl [vmem:[#allocation1 + $0x10] sm:$0xff pattern:$0x75316420]
  %s1335 = scalar_lea.vmem [#allocation1], 32
  %1336 = vst [vmem:[%s1335] ss:$2 sm:$0xff] %v1308
  %v1337 = vld.sshfl [vmem:[#allocation1 + $0x20] sm:$0xff pattern:$0x75316420]
  %s1338 = scalar_lea.vmem [#allocation1], 48
  %1339 = vst [vmem:[%s1338] ss:$2 sm:$0xff] %v1308
  %v1340 = vld.sshfl [vmem:[#allocation1 + $0x30] sm:$0xff pattern:$0x75316420]
  %1341 = vst [vmem:[#allocation1] ss:$2 sm:$0xff] %v1312
  %v1342 = vld.sshfl [vmem:[#allocation1] sm:$0xff pattern:$0x75316420]
  %1343 = vst [vmem:[%s1332] ss:$2 sm:$0xff] %v1312
  %v1344 = vld.sshfl [vmem:[#allocation1 + $0x10] sm:$0xff pattern:$0x75316420]
  %1345 = vst [vmem:[%s1335] ss:$2 sm:$0xff] %v1312
  %v1346 = vld.sshfl [vmem:[#allocation1 + $0x20] sm:$0xff pattern:$0x75316420]
  %1347 = vst [vmem:[%s1338] ss:$2 sm:$0xff] %v1312
  %v1348 = vld.sshfl [vmem:[#allocation1 + $0x30] sm:$0xff pattern:$0x75316420]
  %1349 = vset.pattern.permute.xlu0 64
  %1350 = vperm.xlu0 %1349, %v1331
  %v1351 = vpop.permute.xlu0 %1350
  %1352 = vset.pattern.permute.xlu0 64
  %1353 = vperm.xlu0 %1352, %v1334
  %v1354 = vpop.permute.xlu0 %1353
  %1355 = vset.pattern.permute.xlu0 64
  %1356 = vperm.xlu0 %1355, %v1337
  %v1357 = vpop.permute.xlu0 %1356
  %1358 = vset.pattern.permute.xlu0 64
  %1359 = vperm.xlu0 %1358, %v1340
  %v1360 = vpop.permute.xlu0 %1359
  %1361 = vset.pattern.permute.xlu0 64
  %1362 = vperm.xlu0 %1361, %v1342
  %v1363 = vpop.permute.xlu0 %1362
  %1364 = vset.pattern.permute.xlu0 64
  %1365 = vperm.xlu0 %1364, %v1344
  %v1366 = vpop.permute.xlu0 %1365
  %1367 = vset.pattern.permute.xlu0 64
  %1368 = vperm.xlu0 %1367, %v1346
  %v1369 = vpop.permute.xlu0 %1368
  %1370 = vset.pattern.permute.xlu0 64
  %1371 = vperm.xlu0 %1370, %v1348
  %v1372 = vpop.permute.xlu0 %1371
  %v1373 = vperm.slane %v1351, %v646
  %v1374 = vperm.slane %v1354, %v646
  %v1375 = vperm.slane %v1357, %v646
  %v1376 = vperm.slane %v1360, %v646
  %v1377 = vperm.slane %v1363, %v646
  %v1378 = vperm.slane %v1366, %v646
  %v1379 = vperm.slane %v1369, %v646
  %v1380 = vperm.slane %v1372, %v646
  %v1381 = vsel %vm679, %v1374, %v1373
  %v1382 = vsel %vm681, %v1375, %v1381
  %v1383 = vsel %vm683, %v1376, %v1382
  %v1384 = vsel %vm679, %v1378, %v1377
  %v1385 = vsel %vm681, %v1379, %v1384
  %v1386 = vsel %vm683, %v1380, %v1385
  %v1389 = vadd.f32 %v1321, %v1383
  %v1390 = vadd.f32 %v1329, %v1386
  %vm1391 = vcmp.gt.f32.partialorder %v1389, 0.0
  %vm1392 = vcmp.gt.f32.partialorder %v1390, 0.0
  %v1393 = vmul.f32 %v1389, 0.2
  %v1394 = vmul.f32 %v1390, 0.2
  %v1395 = vsel %vm1391, %v1389, %v1393
  %v1396 = vsel %vm1392, %v1390, %v1394
  %v1397 = vsel %vm746, %v1395, -inf
  %1398 = vmax.xlane.f32.xlu0 %v1397
  %v1399 = vpop.xlane.xlu0 %1398
  %v1400 = vsel %vm746, %v1396, -inf
  %1401 = vmax.xlane.f32.xlu0 %v1400
  %v1402 = vpop.xlane.xlu0 %1401
  %v1403 = vsub.f32 %v1395, %v1399
  %v1404 = vsub.f32 %v1396, %v1402
  %v1405 = vmul.f32 %v1403, 1.442695
  %v1406 = vpow.pop %v1405
  %v1407 = vmul.f32 %v1404, 1.442695
  %v1408 = vpow.pop %v1407
  %v1409 = vsel %vm746, %v1406, 0.0
  %1410 = vadd.xlane.f32.xlu0 %v1409
  %v1411 = vpop.xlane.xlu0 %1410
  %v1412 = vsel %vm746, %v1408, 0.0
  %1413 = vadd.xlane.f32.xlu0 %v1412
  %v1414 = vpop.xlane.xlu0 %1413
  %v1415 = vrcp.pop %v1411
  %v1416 = vrcp.pop %v1414
  %v1417 = vmul.f32 %v1406, %v1415
  %v1418 = vmul.f32 %v1408, %v1416
  %v1419 = vsel %vm746, %v1417, 0.0
  %v1420 = vrot.slane %v1419, 4
  %v1421 = vadd.f32 %v1419, %v1420
  %v1422 = vrot.slane %v1421, 2
  %v1423 = vadd.f32 %v1421, %v1422
  %v1424 = vrot.slane %v1423, 1
  %v1425 = vadd.f32 %v1423, %v1424
  %v1426 = vsel %vm746, %v1418, 0.0
  %v1427 = vrot.slane %v1426, 4
  %v1428 = vadd.f32 %v1426, %v1427
  %v1429 = vrot.slane %v1428, 2
  %v1430 = vadd.f32 %v1428, %v1429
  %v1431 = vrot.slane %v1430, 1
  %v1432 = vadd.f32 %v1430, %v1431
  %v1433 = vmul.f32 %v1425, %v897
  %v1434 = vmul.f32 %v1432, %v897
  %1436 = vset.pattern.permute.xlu0 0
  %1437 = vperm.xlu0 %1436, %v1433
  %v1438 = vpop.permute.xlu0 %1437
  %1441 = vset.pattern.permute.xlu0 0
  %1442 = vperm.xlu0 %1441, %v1434
  %v1443 = vpop.permute.xlu0 %1442
  %v1445 = vmul.f32 %v1438, %v1308
  %v1446 = vmul.f32 %v1443, %v1312
  %1447 = vset.pattern.permute.xlu0 1
  %1448 = vperm.xlu0 %1447, %v1433
  %v1449 = vpop.permute.xlu0 %1448
  %1451 = vset.pattern.permute.xlu0 1
  %1452 = vperm.xlu0 %1451, %v1434
  %v1453 = vpop.permute.xlu0 %1452
  %v1455 = vmul.f32 %v1449, %v1308
  %v1456 = vmul.f32 %v1453, %v1312
  %v1459 = vrot.slane %v1455, 5
  %v1460 = vrot.slane %v1459, 4
  %v1461 = vrot.slane %v1456, 5
  %v1462 = vrot.slane %v1461, 4
  %v1465 = vadd.f32 %v1445, %v1460
  %v1466 = vadd.f32 %v1446, %v1462
  %1467 = vset.pattern.permute.xlu0 2
  %1468 = vperm.xlu0 %1467, %v1433
  %v1469 = vpop.permute.xlu0 %1468
  %1471 = vset.pattern.permute.xlu0 2
  %1472 = vperm.xlu0 %1471, %v1434
  %v1473 = vpop.permute.xlu0 %1472
  %v1475 = vmul.f32 %v1469, %v1308
  %v1476 = vmul.f32 %v1473, %v1312
  %v1479 = vrot.slane %v1475, 6
  %v1480 = vrot.slane %v1479, 4
  %v1481 = vrot.slane %v1476, 6
  %v1482 = vrot.slane %v1481, 4
  %v1485 = vadd.f32 %v1465, %v1480
  %v1486 = vadd.f32 %v1466, %v1482
  %1487 = vset.pattern.permute.xlu0 3
  %1488 = vperm.xlu0 %1487, %v1433
  %v1489 = vpop.permute.xlu0 %1488
  %1491 = vset.pattern.permute.xlu0 3
  %1492 = vperm.xlu0 %1491, %v1434
  %v1493 = vpop.permute.xlu0 %1492
  %v1495 = vmul.f32 %v1489, %v1308
  %v1496 = vmul.f32 %v1493, %v1312
  %v1499 = vrot.slane %v1495, 7
  %v1500 = vrot.slane %v1499, 4
  %v1501 = vrot.slane %v1496, 7
  %v1502 = vrot.slane %v1501, 4
  %v1505 = vadd.f32 %v1485, %v1500
  %v1506 = vadd.f32 %v1486, %v1502
  %v1507 = vld [vmem:[%s12] sm:$0x1]
  %v1509 = vperm.slane %v1507, 0
  %v1510 = vrot.slane %v1509, 1
  %v1513 = vadd.f32 %v1505, %v1509
  %v1514 = vadd.f32 %v1506, %v1510
  %v1515 = vpack.c.bf16 %v1513, %v1513
  %v1516 = vpack.c.bf16 %v1514, %v1514
  %v1517 = vld [vmem:[%s13] sm:$0xf]
  %v1518 = vld [vmem:[%s13 + $0x4] sm:$0xf]
  %v1519 = vld [vmem:[%s13 + $0x8] sm:$0xf]
  %v1520 = vld [vmem:[%s13 + $0xc] sm:$0xf]
  %v1521 = vld [vmem:[%s13 + $0x10] sm:$0xf]
  %v1522 = vld [vmem:[%s13 + $0x14] sm:$0xf]
  %v1523 = vld [vmem:[%s13 + $0x18] sm:$0xf]
  %v1524 = vld [vmem:[%s13 + $0x1c] sm:$0xf]
  %v1525 = vld [vmem:[%s14] sm:$0x1]
  %v1527 = vperm.slane %v1525, 0
  %v1531 = vunpack.c.l.b16 %v1515
  %v1532 = vunpack.c.l.b16 %v1516
  %v1533 = vrot.slane %v1532, 7
  %v1534 = vsel %vm679, %v1533, %v1531
  %v1535 = vpack.c.b16 %v1534, %v1534
  %v1544 = vunpack.c.l.b16 %v1517
  %v1545 = vunpack.c.l.b16 %v1518
  %v1546 = vunpack.c.l.b16 %v1519
  %v1547 = vunpack.c.l.b16 %v1520
  %v1548 = vunpack.c.l.b16 %v1521
  %v1549 = vunpack.c.l.b16 %v1522
  %v1550 = vunpack.c.l.b16 %v1523
  %v1551 = vunpack.c.l.b16 %v1524
  %v1552 = vpack.c.b16 %v1545, %v1544
  %v1553 = vpack.c.b16 %v1547, %v1546
  %v1554 = vpack.c.b16 %v1549, %v1548
  %v1555 = vpack.c.b16 %v1551, %v1550
  %v1561 = vsel %vm309, %v1535, 0
  %1563 = vmatpush.bf16.msra.mxu0 0
  %1564 = vmatpush.bf16.msra.mxu0 0
  %1565 = vmatpush.bf16.msra.mxu0 0
  %1566 = vmatpush.bf16.msra.mxu0 0
  %1567 = vmatpush.bf16.msra.mxu0 %v1555
  %1568 = vmatpush.bf16.msra.mxu0 %v1554
  %1569 = vmatpush.bf16.msra.mxu0 %v1553
  %1570 = vmatpush.bf16.msra.mxu0 %v1552
  %1571 = vmatmul.bf16.gmra.mxu0 %v1561
  %v1572 = vpop.f32.mrf.mxu0
  %v1573 = vadd.f32 %v1527, %v1572
  %v1574 = vpop.f32.mrf.mxu0
  %1575 = vdwg.mxu0
  %vm1576 = vcmp.gt.f32.partialorder %v1573, 0.0
  %v1577 = vmul.f32 %v1573, 0.01
  %v1578 = vsel %vm1576, %v1573, %v1577
  %1580 = vst [vmem:[#allocation1] ss:$4 sm:$0xff] %v72
  %v1581 = vld.sshfl [vmem:[#allocation1] sm:$0xff pattern:$0x73625140]
  %v1582 = vld.sshfl [vmem:[#allocation1 + $0x8] sm:$0xff pattern:$0x73625140]
  %v1583 = vld.sshfl [vmem:[#allocation1 + $0x10] sm:$0xff pattern:$0x73625140]
  %v1584 = vld.sshfl [vmem:[#allocation1 + $0x18] sm:$0xff pattern:$0x73625140]
  %v1589 = vpack.c.bf16 %v1581, %v1581
  %v1590 = vpack.c.bf16 %v1582, %v1582
  %v1591 = vpack.c.bf16 %v1583, %v1583
  %v1592 = vpack.c.bf16 %v1584, %v1584
  %v1593 = vld [vmem:[%s15] sm:$0xf]
  %v1594 = vld [vmem:[%s15 + $0x4] sm:$0xf]
  %v1595 = vld [vmem:[%s15 + $0x8] sm:$0xf]
  %v1596 = vld [vmem:[%s15 + $0xc] sm:$0xf]
  %v1597 = vld [vmem:[%s15 + $0x10] sm:$0xf]
  %v1598 = vld [vmem:[%s15 + $0x14] sm:$0xf]
  %v1599 = vld [vmem:[%s15 + $0x18] sm:$0xf]
  %v1600 = vld [vmem:[%s15 + $0x1c] sm:$0xf]
  %v1601 = vld [vmem:[%s15 + $0x20] sm:$0xf]
  %v1602 = vld [vmem:[%s15 + $0x24] sm:$0xf]
  %v1603 = vld [vmem:[%s15 + $0x28] sm:$0xf]
  %v1604 = vld [vmem:[%s15 + $0x2c] sm:$0xf]
  %v1605 = vld [vmem:[%s15 + $0x30] sm:$0xf]
  %v1606 = vld [vmem:[%s15 + $0x34] sm:$0xf]
  %v1607 = vld [vmem:[%s15 + $0x38] sm:$0xf]
  %v1608 = vld [vmem:[%s15 + $0x3c] sm:$0xf]
  %v1609 = vld [vmem:[%s15 + $0x40] sm:$0xf]
  %v1610 = vld [vmem:[%s15 + $0x44] sm:$0xf]
  %v1611 = vld [vmem:[%s15 + $0x48] sm:$0xf]
  %v1612 = vld [vmem:[%s15 + $0x4c] sm:$0xf]
  %v1613 = vld [vmem:[%s15 + $0x50] sm:$0xf]
  %v1614 = vld [vmem:[%s15 + $0x54] sm:$0xf]
  %v1615 = vld [vmem:[%s15 + $0x58] sm:$0xf]
  %v1616 = vld [vmem:[%s15 + $0x5c] sm:$0xf]
  %v1617 = vld [vmem:[%s15 + $0x60] sm:$0xf]
  %v1618 = vld [vmem:[%s15 + $0x64] sm:$0xf]
  %v1619 = vld [vmem:[%s15 + $0x68] sm:$0xf]
  %v1620 = vld [vmem:[%s15 + $0x6c] sm:$0xf]
  %v1621 = vld [vmem:[%s15 + $0x70] sm:$0xf]
  %v1622 = vld [vmem:[%s15 + $0x74] sm:$0xf]
  %v1623 = vld [vmem:[%s15 + $0x78] sm:$0xf]
  %v1624 = vld [vmem:[%s15 + $0x7c] sm:$0xf]
  %v1625 = vld [vmem:[%s15 + $0x80] sm:$0xf]
  %v1626 = vld [vmem:[%s15 + $0x84] sm:$0xf]
  %v1627 = vld [vmem:[%s15 + $0x88] sm:$0xf]
  %v1628 = vld [vmem:[%s15 + $0x8c] sm:$0xf]
  %v1629 = vld [vmem:[%s15 + $0x90] sm:$0xf]
  %v1630 = vld [vmem:[%s15 + $0x94] sm:$0xf]
  %v1631 = vld [vmem:[%s15 + $0x98] sm:$0xf]
  %v1632 = vld [vmem:[%s15 + $0x9c] sm:$0xf]
  %v1633 = vld [vmem:[%s15 + $0xa0] sm:$0xf]
  %v1634 = vld [vmem:[%s15 + $0xa4] sm:$0xf]
  %v1635 = vld [vmem:[%s15 + $0xa8] sm:$0xf]
  %v1636 = vld [vmem:[%s15 + $0xac] sm:$0xf]
  %v1637 = vld [vmem:[%s15 + $0xb0] sm:$0xf]
  %v1638 = vld [vmem:[%s15 + $0xb4] sm:$0xf]
  %v1639 = vld [vmem:[%s15 + $0xb8] sm:$0xf]
  %v1640 = vld [vmem:[%s15 + $0xbc] sm:$0xf]
  %v1641 = vld [vmem:[%s15 + $0xc0] sm:$0xf]
  %v1642 = vld [vmem:[%s15 + $0xc4] sm:$0xf]
  %v1643 = vld [vmem:[%s15 + $0xc8] sm:$0xf]
  %v1644 = vld [vmem:[%s15 + $0xcc] sm:$0xf]
  %v1645 = vld [vmem:[%s15 + $0xd0] sm:$0xf]
  %v1646 = vld [vmem:[%s15 + $0xd4] sm:$0xf]
  %v1647 = vld [vmem:[%s15 + $0xd8] sm:$0xf]
  %v1648 = vld [vmem:[%s15 + $0xdc] sm:$0xf]
  %v1649 = vld [vmem:[%s15 + $0xe0] sm:$0xf]
  %v1650 = vld [vmem:[%s15 + $0xe4] sm:$0xf]
  %v1651 = vld [vmem:[%s15 + $0xe8] sm:$0xf]
  %v1652 = vld [vmem:[%s15 + $0xec] sm:$0xf]
  %v1653 = vld [vmem:[%s15 + $0xf0] sm:$0xf]
  %v1654 = vld [vmem:[%s15 + $0xf4] sm:$0xf]
  %v1655 = vld [vmem:[%s15 + $0xf8] sm:$0xf]
  %v1656 = vld [vmem:[%s15 + $0xfc] sm:$0xf]
  %v1657 = vld [vmem:[%s16] sm:$0x1]
  %v1659 = vperm.slane %v1657, 0
  %v1725 = vunpack.c.l.b16 %v1593
  %v1726 = vunpack.c.l.b16 %v1594
  %v1727 = vunpack.c.l.b16 %v1595
  %v1728 = vunpack.c.l.b16 %v1596
  %v1729 = vunpack.c.l.b16 %v1597
  %v1730 = vunpack.c.l.b16 %v1598
  %v1731 = vunpack.c.l.b16 %v1599
  %v1732 = vunpack.c.l.b16 %v1600
  %v1733 = vunpack.c.l.b16 %v1601
  %v1734 = vunpack.c.l.b16 %v1602
  %v1735 = vunpack.c.l.b16 %v1603
  %v1736 = vunpack.c.l.b16 %v1604
  %v1737 = vunpack.c.l.b16 %v1605
  %v1738 = vunpack.c.l.b16 %v1606
  %v1739 = vunpack.c.l.b16 %v1607
  %v1740 = vunpack.c.l.b16 %v1608
  %v1741 = vunpack.c.l.b16 %v1609
  %v1742 = vunpack.c.l.b16 %v1610
  %v1743 = vunpack.c.l.b16 %v1611
  %v1744 = vunpack.c.l.b16 %v1612
  %v1745 = vunpack.c.l.b16 %v1613
  %v1746 = vunpack.c.l.b16 %v1614
  %v1747 = vunpack.c.l.b16 %v1615
  %v1748 = vunpack.c.l.b16 %v1616
  %v1749 = vunpack.c.l.b16 %v1617
  %v1750 = vunpack.c.l.b16 %v1618
  %v1751 = vunpack.c.l.b16 %v1619
  %v1752 = vunpack.c.l.b16 %v1620
  %v1753 = vunpack.c.l.b16 %v1621
  %v1754 = vunpack.c.l.b16 %v1622
  %v1755 = vunpack.c.l.b16 %v1623
  %v1756 = vunpack.c.l.b16 %v1624
  %v1757 = vunpack.c.l.b16 %v1625
  %v1758 = vunpack.c.l.b16 %v1626
  %v1759 = vunpack.c.l.b16 %v1627
  %v1760 = vunpack.c.l.b16 %v1628
  %v1761 = vunpack.c.l.b16 %v1629
  %v1762 = vunpack.c.l.b16 %v1630
  %v1763 = vunpack.c.l.b16 %v1631
  %v1764 = vunpack.c.l.b16 %v1632
  %v1765 = vunpack.c.l.b16 %v1633
  %v1766 = vunpack.c.l.b16 %v1634
  %v1767 = vunpack.c.l.b16 %v1635
  %v1768 = vunpack.c.l.b16 %v1636
  %v1769 = vunpack.c.l.b16 %v1637
  %v1770 = vunpack.c.l.b16 %v1638
  %v1771 = vunpack.c.l.b16 %v1639
  %v1772 = vunpack.c.l.b16 %v1640
  %v1773 = vunpack.c.l.b16 %v1641
  %v1774 = vunpack.c.l.b16 %v1642
  %v1775 = vunpack.c.l.b16 %v1643
  %v1776 = vunpack.c.l.b16 %v1644
  %v1777 = vunpack.c.l.b16 %v1645
  %v1778 = vunpack.c.l.b16 %v1646
  %v1779 = vunpack.c.l.b16 %v1647
  %v1780 = vunpack.c.l.b16 %v1648
  %v1781 = vunpack.c.l.b16 %v1649
  %v1782 = vunpack.c.l.b16 %v1650
  %v1783 = vunpack.c.l.b16 %v1651
  %v1784 = vunpack.c.l.b16 %v1652
  %v1785 = vunpack.c.l.b16 %v1653
  %v1786 = vunpack.c.l.b16 %v1654
  %v1787 = vunpack.c.l.b16 %v1655
  %v1788 = vunpack.c.l.b16 %v1656
  %v1789 = vpack.c.b16 %v1726, %v1725
  %v1790 = vpack.c.b16 %v1728, %v1727
  %v1791 = vpack.c.b16 %v1730, %v1729
  %v1792 = vpack.c.b16 %v1732, %v1731
  %v1793 = vpack.c.b16 %v1734, %v1733
  %v1794 = vpack.c.b16 %v1736, %v1735
  %v1795 = vpack.c.b16 %v1738, %v1737
  %v1796 = vpack.c.b16 %v1740, %v1739
  %v1797 = vpack.c.b16 %v1742, %v1741
  %v1798 = vpack.c.b16 %v1744, %v1743
  %v1799 = vpack.c.b16 %v1746, %v1745
  %v1800 = vpack.c.b16 %v1748, %v1747
  %v1801 = vpack.c.b16 %v1750, %v1749
  %v1802 = vpack.c.b16 %v1752, %v1751
  %v1803 = vpack.c.b16 %v1754, %v1753
  %v1804 = vpack.c.b16 %v1756, %v1755
  %v1805 = vpack.c.b16 %v1758, %v1757
  %v1806 = vpack.c.b16 %v1760, %v1759
  %v1807 = vpack.c.b16 %v1762, %v1761
  %v1808 = vpack.c.b16 %v1764, %v1763
  %v1809 = vpack.c.b16 %v1766, %v1765
  %v1810 = vpack.c.b16 %v1768, %v1767
  %v1811 = vpack.c.b16 %v1770, %v1769
  %v1812 = vpack.c.b16 %v1772, %v1771
  %v1813 = vpack.c.b16 %v1774, %v1773
  %v1814 = vpack.c.b16 %v1776, %v1775
  %v1815 = vpack.c.b16 %v1778, %v1777
  %v1816 = vpack.c.b16 %v1780, %v1779
  %v1817 = vpack.c.b16 %v1782, %v1781
  %v1818 = vpack.c.b16 %v1784, %v1783
  %v1819 = vpack.c.b16 %v1786, %v1785
  %v1820 = vpack.c.b16 %v1788, %v1787
  %1853 = vmatpush.bf16.msra.mxu0 %v1796
  %1854 = vmatpush.bf16.msra.mxu0 %v1795
  %1855 = vmatpush.bf16.msra.mxu0 %v1794
  %1856 = vmatpush.bf16.msra.mxu0 %v1793
  %1857 = vmatpush.bf16.msra.mxu0 %v1792
  %1858 = vmatpush.bf16.msra.mxu0 %v1791
  %1859 = vmatpush.bf16.msra.mxu0 %v1790
  %1860 = vmatpush.bf16.msra.mxu0 %v1789
  %1861 = vmatmul.bf16.gmra.mxu0 %v1589
  %v1862 = vpop.f32.mrf.mxu0
  %v1863 = vadd.f32 %v1659, %v1862
  %v1864 = vpop.f32.mrf.mxu0
  %1865 = vdwg.mxu0
  %1866 = vmatpush.bf16.msra.mxu0 %v1804
  %1867 = vmatpush.bf16.msra.mxu0 %v1803
  %1868 = vmatpush.bf16.msra.mxu0 %v1802
  %1869 = vmatpush.bf16.msra.mxu0 %v1801
  %1870 = vmatpush.bf16.msra.mxu0 %v1800
  %1871 = vmatpush.bf16.msra.mxu0 %v1799
  %1872 = vmatpush.bf16.msra.mxu0 %v1798
  %1873 = vmatpush.bf16.msra.mxu0 %v1797
  %1874 = vmatmul.bf16.gmra.mxu0 %v1590
  %v1875 = vpop.f32.mrf.mxu0
  %v1876 = vadd.f32 %v1863, %v1875
  %v1877 = vpop.f32.mrf.mxu0
  %1878 = vdwg.mxu0
  %1879 = vmatpush.bf16.msra.mxu0 %v1812
  %1880 = vmatpush.bf16.msra.mxu0 %v1811
  %1881 = vmatpush.bf16.msra.mxu0 %v1810
  %1882 = vmatpush.bf16.msra.mxu0 %v1809
  %1883 = vmatpush.bf16.msra.mxu0 %v1808
  %1884 = vmatpush.bf16.msra.mxu0 %v1807
  %1885 = vmatpush.bf16.msra.mxu0 %v1806
  %1886 = vmatpush.bf16.msra.mxu0 %v1805
  %1887 = vmatmul.bf16.gmra.mxu0 %v1591
  %v1888 = vpop.f32.mrf.mxu0
  %v1889 = vadd.f32 %v1876, %v1888
  %v1890 = vpop.f32.mrf.mxu0
  %1891 = vdwg.mxu0
  %1892 = vmatpush.bf16.msra.mxu0 %v1820
  %1893 = vmatpush.bf16.msra.mxu0 %v1819
  %1894 = vmatpush.bf16.msra.mxu0 %v1818
  %1895 = vmatpush.bf16.msra.mxu0 %v1817
  %1896 = vmatpush.bf16.msra.mxu0 %v1816
  %1897 = vmatpush.bf16.msra.mxu0 %v1815
  %1898 = vmatpush.bf16.msra.mxu0 %v1814
  %1899 = vmatpush.bf16.msra.mxu0 %v1813
  %1900 = vmatmul.bf16.gmra.mxu0 %v1592
  %v1901 = vpop.f32.mrf.mxu0
  %v1902 = vadd.f32 %v1889, %v1901
  %v1903 = vpop.f32.mrf.mxu0
  %1904 = vdwg.mxu0
  %vm1905 = vcmp.gt.f32.partialorder %v1902, 0.0
  %v1906 = vmul.f32 %v1902, 0.01
  %v1907 = vsel %vm1905, %v1902, %v1906
  %v1908 = vpack.c.bf16 %v1578, %v1578
  %v1909 = vld [vmem:[%s17] sm:$0xf]
  %v1910 = vld [vmem:[%s17 + $0x4] sm:$0xf]
  %v1911 = vld [vmem:[%s17 + $0x8] sm:$0xf]
  %v1912 = vld [vmem:[%s17 + $0xc] sm:$0xf]
  %v1913 = vld [vmem:[%s17 + $0x10] sm:$0xf]
  %v1914 = vld [vmem:[%s17 + $0x14] sm:$0xf]
  %v1915 = vld [vmem:[%s17 + $0x18] sm:$0xf]
  %v1916 = vld [vmem:[%s17 + $0x1c] sm:$0xf]
  %v1917 = vld [vmem:[%s17 + $0x20] sm:$0xf]
  %v1918 = vld [vmem:[%s17 + $0x24] sm:$0xf]
  %v1919 = vld [vmem:[%s17 + $0x28] sm:$0xf]
  %v1920 = vld [vmem:[%s17 + $0x2c] sm:$0xf]
  %v1921 = vld [vmem:[%s17 + $0x30] sm:$0xf]
  %v1922 = vld [vmem:[%s17 + $0x34] sm:$0xf]
  %v1923 = vld [vmem:[%s17 + $0x38] sm:$0xf]
  %v1924 = vld [vmem:[%s17 + $0x3c] sm:$0xf]
  %v1925 = vpack.c.bf16 %v1907, %v1907
  %v1926 = vld [vmem:[%s18] sm:$0xf]
  %v1927 = vld [vmem:[%s18 + $0x4] sm:$0xf]
  %v1928 = vld [vmem:[%s18 + $0x8] sm:$0xf]
  %v1929 = vld [vmem:[%s18 + $0xc] sm:$0xf]
  %v1930 = vld [vmem:[%s18 + $0x10] sm:$0xf]
  %v1931 = vld [vmem:[%s18 + $0x14] sm:$0xf]
  %v1932 = vld [vmem:[%s18 + $0x18] sm:$0xf]
  %v1933 = vld [vmem:[%s18 + $0x1c] sm:$0xf]
  %v1934 = vld [vmem:[%s18 + $0x20] sm:$0xf]
  %v1935 = vld [vmem:[%s18 + $0x24] sm:$0xf]
  %v1936 = vld [vmem:[%s18 + $0x28] sm:$0xf]
  %v1937 = vld [vmem:[%s18 + $0x2c] sm:$0xf]
  %v1938 = vld [vmem:[%s18 + $0x30] sm:$0xf]
  %v1939 = vld [vmem:[%s18 + $0x34] sm:$0xf]
  %v1940 = vld [vmem:[%s18 + $0x38] sm:$0xf]
  %v1941 = vld [vmem:[%s18 + $0x3c] sm:$0xf]
  %v1958 = vunpack.c.l.b16 %v1926
  %v1959 = vunpack.c.l.b16 %v1927
  %v1960 = vunpack.c.l.b16 %v1928
  %v1961 = vunpack.c.l.b16 %v1929
  %v1962 = vunpack.c.l.b16 %v1930
  %v1963 = vunpack.c.l.b16 %v1931
  %v1964 = vunpack.c.l.b16 %v1932
  %v1965 = vunpack.c.l.b16 %v1933
  %v1966 = vunpack.c.l.b16 %v1934
  %v1967 = vunpack.c.l.b16 %v1935
  %v1968 = vunpack.c.l.b16 %v1936
  %v1969 = vunpack.c.l.b16 %v1937
  %v1970 = vunpack.c.l.b16 %v1938
  %v1971 = vunpack.c.l.b16 %v1939
  %v1972 = vunpack.c.l.b16 %v1940
  %v1973 = vunpack.c.l.b16 %v1941
  %v1974 = vpack.c.b16 %v1959, %v1958
  %v1975 = vpack.c.b16 %v1961, %v1960
  %v1976 = vpack.c.b16 %v1963, %v1962
  %v1977 = vpack.c.b16 %v1965, %v1964
  %v1978 = vpack.c.b16 %v1967, %v1966
  %v1979 = vpack.c.b16 %v1969, %v1968
  %v1980 = vpack.c.b16 %v1971, %v1970
  %v1981 = vpack.c.b16 %v1973, %v1972
  %1990 = vmatpush.bf16.msra.mxu0 %v1981
  %1991 = vmatpush.bf16.msra.mxu0 %v1980
  %1992 = vmatpush.bf16.msra.mxu0 %v1979
  %1993 = vmatpush.bf16.msra.mxu0 %v1978
  %1994 = vmatpush.bf16.msra.mxu0 %v1977
  %1995 = vmatpush.bf16.msra.mxu0 %v1976
  %1996 = vmatpush.bf16.msra.mxu0 %v1975
  %1997 = vmatpush.bf16.msra.mxu0 %v1974
  %1998 = vmatmul.bf16.gmra.mxu0 %v1925
  %v1999 = vpop.f32.mrf.mxu0
  %v2000 = vadd.f32 0.0, %v1999
  %v2001 = vpop.f32.mrf.mxu0
  %2002 = vdwg.mxu0
  %v2019 = vunpack.c.l.b16 %v1909
  %v2020 = vunpack.c.l.b16 %v1910
  %v2021 = vunpack.c.l.b16 %v1911
  %v2022 = vunpack.c.l.b16 %v1912
  %v2023 = vunpack.c.l.b16 %v1913
  %v2024 = vunpack.c.l.b16 %v1914
  %v2025 = vunpack.c.l.b16 %v1915
  %v2026 = vunpack.c.l.b16 %v1916
  %v2027 = vunpack.c.l.b16 %v1917
  %v2028 = vunpack.c.l.b16 %v1918
  %v2029 = vunpack.c.l.b16 %v1919
  %v2030 = vunpack.c.l.b16 %v1920
  %v2031 = vunpack.c.l.b16 %v1921
  %v2032 = vunpack.c.l.b16 %v1922
  %v2033 = vunpack.c.l.b16 %v1923
  %v2034 = vunpack.c.l.b16 %v1924
  %v2035 = vpack.c.b16 %v2020, %v2019
  %v2036 = vpack.c.b16 %v2022, %v2021
  %v2037 = vpack.c.b16 %v2024, %v2023
  %v2038 = vpack.c.b16 %v2026, %v2025
  %v2039 = vpack.c.b16 %v2028, %v2027
  %v2040 = vpack.c.b16 %v2030, %v2029
  %v2041 = vpack.c.b16 %v2032, %v2031
  %v2042 = vpack.c.b16 %v2034, %v2033
  %2051 = vmatpush.bf16.msra.mxu0 %v2042
  %2052 = vmatpush.bf16.msra.mxu0 %v2041
  %2053 = vmatpush.bf16.msra.mxu0 %v2040
  %2054 = vmatpush.bf16.msra.mxu0 %v2039
  %2055 = vmatpush.bf16.msra.mxu0 %v2038
  %2056 = vmatpush.bf16.msra.mxu0 %v2037
  %2057 = vmatpush.bf16.msra.mxu0 %v2036
  %2058 = vmatpush.bf16.msra.mxu0 %v2035
  %2059 = vmatmul.bf16.gmra.mxu0 %v1908
  %v2060 = vpop.f32.mrf.mxu0
  %v2061 = vadd.f32 %v2000, %v2060
  %v2062 = vpop.f32.mrf.mxu0
  %2063 = vdwg.mxu0
  %v2064 = vld [vmem:[#allocation2] sm:$0x1]
  %v2066 = vperm.slane %v2064, 0
  %v2068 = vadd.f32 %v2061, %v2066
  %v2069 = vsub.f32 0.0, %v2068
  %v2070 = vmul.f32 %v2069, 1.442695
  %v2071 = vpow.pop %v2070
  %v2072 = vadd.f32 %v2071, 1.0
  %v2073 = vrcp.pop %v2072
  %v2074 = vmul.f32 %v2072, %v2073
  %v2075 = vsub.f32 1.0, %v2074
  %v2076 = vmul.f32 %v2073, %v2075
  %v2077 = vadd.f32 %v2073, %v2076
  %vm2078 = vweird.f32 %v2072
  %vm2079 = vweird.f32 %v2073
  %vm2080 = vmor %vm2078, %vm2079
  %v2081 = vsel %vm2080, %v2073, %v2077
  %v2082 = vand.u32 2147483647, %v2072
  %vm2083 = vcmp.eq.f32.partialorder %v2082, 8.507059e+37
  %v2084 = vand.u32 %v2072, 2147483648
  %v2085 = vor.u32 1.1754944e-38, %v2084
  %v2086 = vsel %vm2083, %v2085, %v2081
  %v2087 = vmul.f32 1.0, %v2086
  %vm2088 = vcmask 1024
  %2089 = vst.msk [vmem:[%s20] sm:$0x3] %vm2088, %v2087
  // Predicated region
  $region82: #{gcn_emb_disc_forward.1} parent=0 // pred_check
    _
  $region83: #{gcn_emb_disc_forward.1} parent=0 // pred_check_branch
    %2091 = sbr.rel (0) target = $region85
  $region84: #{gcn_emb_disc_forward.1} parent=0 // pred_region
    _
  $region85: #{gcn_emb_disc_forward.1} parent=0 // pred_fallthru
    _
  // Predicated region
  $region86: #{gcn_emb_disc_forward.1} parent=0 // pred_check
    _
  $region87: #{gcn_emb_disc_forward.1} parent=0 // pred_check_branch
    %2093 = sbr.rel (0) target = $region89
  $region88: #{gcn_emb_disc_forward.1} parent=0 // pred_region
    _
  $region89: #{gcn_emb_disc_forward.1} parent=0 // pred_fallthru
    _

</llo_original>
